<compile_context>
chip_gen: v5e
topology: v5e:2x2
jax: 0.10.0
libtpu: 0.0.40
codegen_flags: <defaults>
</compile_context>

<pallas_src>
import jax
import jax.numpy as jnp
from jax.experimental import pallas as pl
from jax.experimental.pallas import tpu as pltpu

# Small, deterministic test-time hyperparameters (analogue of Hps, scaled down)
ENC_HIDDEN = 32   # hp.enc_hidden_size
NZ = 16           # hp.Nz
INPUT_DIM = 5     # stroke-5 feature size
SEQ_LEN = 8
BATCH = 16        # batched per review; wrapper pads any batch to B_BLK

B_BLK = 8         # batch rows per grid step (sublane-aligned)
OUT_W = 128       # packed output padded to one full lane group


def _round_up(x, m):
    return ((x + m - 1) // m) * m


# Per-direction hidden padded so 2*HID_PAD is a multiple of 128 lanes
# (=> every gate block is exactly one vreg; no mid-vreg gate slices).
HID_PAD = _round_up(ENC_HIDDEN, 64)


def _encoder_kernel(x_ref, wih_ref, bih_ref, whh_ref, whead_ref, bhead_ref,
                    noise_ref, out_ref):
    """One batch-group of the EncoderRNN forward, fully VMEM-resident.

    x_ref:     [T, B_BLK, 10]     time-major [x | x_time_reversed] features
    wih_ref:   [10, 8*HP]         fused input->gates weight; fused gate order
                                  [i|f|o|g], each 2*HP lanes laid out as
                                  [fwd H | pad | bwd H | pad]
    bih_ref:   [1, 8*HP]          fused (b_ih + b_hh) bias, same layout
    whh_ref:   [2*HP, 8*HP]       block-diagonal fused recurrent weight
    whead_ref: [2*HP, 2*Nz]       [wmu | wsig] (pad rows zero)
    bhead_ref: [1, 2*Nz]          [bmu | bsig]
    noise_ref: [B_BLK, Nz]
    out_ref:   [B_BLK, OUT_W]     packed [z | mu | sigma_hat | zero pad]
    """
    T, B, _ = x_ref.shape
    STATE, GTOT = whh_ref.shape            # 2*HP, 8*HP
    GP = GTOT // 4                         # lanes per gate block (= 128)
    Nz = noise_ref.shape[1]
    out_w = out_ref.shape[1]

    # ---- prologue: ONE fused input projection for both dirs & all steps ----
    x2d = x_ref[...].reshape(T * B, x_ref.shape[2])
    xproj = (jnp.dot(x2d, wih_ref[...], preferred_element_type=jnp.float32)
             + bih_ref[...])                           # [T*B, 8*HP]
    xproj = xproj.reshape(T, B, GTOT)                  # 8-row aligned per step

    whh = whh_ref[...]
    h = jnp.zeros((B, STATE), jnp.float32)             # [h_fwd | pad | h_bwd | pad]
    c = jnp.zeros((B, STATE), jnp.float32)

    # TODO(synk): keep whh resident in the MXU across steps via
    # pltpu.matmul_push_rhs / matmul_acc_lhs / matmul_pop.
    for t in range(T):                                 # static unroll (T small)
        # single fused recurrent matmul on the critical path
        gates = xproj[t] + jnp.dot(h, whh, preferred_element_type=jnp.float32)
        # activation split by lane group: sigmoid over [i|f|o], tanh over [g]
        sig = jax.nn.sigmoid(gates[:, 0:3 * GP])
        gg = jnp.tanh(gates[:, 3 * GP:4 * GP])
        gi = sig[:, 0:GP]
        gf = sig[:, GP:2 * GP]
        go = sig[:, 2 * GP:3 * GP]
        c = gf * c + gi * gg                           # pad lanes stay exactly 0
        h = go * jnp.tanh(c)

    # h == [h_fwd_final | pad | h_bwd_final | pad] == padded hidden_cat
    # ---- merged output head: one [B, 2*HP] @ [2*HP, 2*Nz] matmul -----------
    head = (jnp.dot(h, whead_ref[...], preferred_element_type=jnp.float32)
            + bhead_ref[...])                          # [mu | sigma_hat]
    mu = head[:, 0:Nz]
    sighat = head[:, Nz:2 * Nz]
    sigma = jnp.exp(sighat * 0.5)
    z = mu + sigma * noise_ref[...]

    # packed, lane-dense (128-wide) store: [z | mu | sigma_hat | zeros]
    pad = jnp.zeros((B, out_w - 3 * Nz), jnp.float32)
    out_ref[...] = jnp.concatenate([z, mu, sighat, pad], axis=1)


def init_params(key, hidden=ENC_HIDDEN, nz=NZ, in_dim=INPUT_DIM):
    """Deterministic synthetic parameters with PyTorch-like uniform init."""
    ks = jax.random.split(key, 10)
    bound = 1.0 / jnp.sqrt(hidden)

    def u(k, shape):
        return jax.random.uniform(k, shape, jnp.float32, -bound, bound)

    return dict(
        # forward direction (transposed: [in, 4H] / [H, 4H], gate order i,f,g,o)
        wih_f=u(ks[0], (in_dim, 4 * hidden)),
        whh_f=u(ks[1], (hidden, 4 * hidden)),
        b_f=u(ks[2], (1, 4 * hidden)),        # b_ih + b_hh folded into one bias
        # backward direction
        wih_b=u(ks[3], (in_dim, 4 * hidden)),
        whh_b=u(ks[4], (hidden, 4 * hidden)),
        b_b=u(ks[5], (1, 4 * hidden)),
        # fc_mu / fc_sigma, transposed: [2H, Nz]
        wmu=u(ks[6], (2 * hidden, nz)),
        bmu=u(ks[7], (1, nz)),
        wsig=u(ks[8], (2 * hidden, nz)),
        bsig=u(ks[9], (1, nz)),
    )


def _fuse_params(params, hidden=ENC_HIDDEN, hid_pad=HID_PAD):
    """Build fused, lane-aligned, zero-padded weights consumed by the kernel."""
    H, HP = hidden, hid_pad
    in_dim = params["wih_f"].shape[0]
    nz = params["wmu"].shape[1]
    f32 = jnp.float32

    def expand_cols(wf, wb):
        # wf, wb: [..., 4H] in PyTorch gate order (i, f, g, o).
        # Returns [..., 8*HP] in fused gate order (i, f, o, g); each gate block
        # is 2*HP lanes laid out [fwd H | pad | bwd H | pad].
        lead = wf.shape[:-1]
        zpad = jnp.zeros(lead + (HP - H,), f32)
        parts = []
        for src in (0, 1, 3, 2):          # i, f, o, g
            parts += [wf[..., src * H:(src + 1) * H], zpad,
                      wb[..., src * H:(src + 1) * H], zpad]
        return jnp.concatenate(parts, axis=-1)

    # Input weight over the combined [x | x_reversed] 2*in_dim features:
    # rows 0:in_dim feed the fwd lanes, rows in_dim:2*in_dim feed the bwd lanes.
    z_in = jnp.zeros((in_dim, 4 * H), f32)
    wih = expand_cols(jnp.concatenate([params["wih_f"], z_in], axis=0),
                      jnp.concatenate([z_in, params["wih_b"]], axis=0))
    bih = expand_cols(params["b_f"], params["b_b"])                    # [1, 8*HP]

    # Block-diagonal recurrent weight; row layout matches the padded state.
    z_hh = jnp.zeros((HP - H, 4 * H), f32)
    z_full = jnp.zeros((HP, 4 * H), f32)
    wf_rows = jnp.concatenate([params["whh_f"], z_hh, z_full], axis=0)  # [2HP,4H]
    wb_rows = jnp.concatenate([z_full, params["whh_b"], z_hh], axis=0)  # [2HP,4H]
    whh = expand_cols(wf_rows, wb_rows)                                 # [2HP,8HP]

    # Merged mu/sigma head, rows expanded to the padded state layout.
    wcat = jnp.concatenate([params["wmu"], params["wsig"]], axis=1)     # [2H,2Nz]
    z_row = jnp.zeros((HP - H, 2 * nz), f32)
    whead = jnp.concatenate([wcat[0:H], z_row, wcat[H:2 * H], z_row], axis=0)
    bhead = jnp.concatenate([params["bmu"], params["bsig"]], axis=1)    # [1,2Nz]
    return wih, bih, whh, whead, bhead


@jax.jit
def encoder_forward(inputs, params, noise):
    """Pallas-backed EncoderRNN.forward.  inputs: [T, B, 5] float32."""
    T, B, in_dim = inputs.shape
    nz = noise.shape[1]
    wih, bih, whh, whead, bhead = _fuse_params(params)

    # Hoist the direction handling out of the kernel: [x | x_time_reversed].
    xc = jnp.concatenate([inputs, inputs[::-1]], axis=-1)      # [T, B, 2*in_dim]

    # Pad batch up to a multiple of B_BLK (sublane alignment + grid blocks).
    n_grp = (B + B_BLK - 1) // B_BLK
    b_pad = n_grp * B_BLK - B
    if b_pad:
        xc = jnp.pad(xc, ((0, 0), (0, b_pad), (0, 0)))
        noise_p = jnp.pad(noise, ((0, b_pad), (0, 0)))
    else:
        noise_p = noise

    gtot = whh.shape[1]
    state = whh.shape[0]

    out = pl.pallas_call(
        _encoder_kernel,
        out_shape=jax.ShapeDtypeStruct((n_grp * B_BLK, OUT_W), jnp.float32),
        grid_spec=pltpu.PrefetchScalarGridSpec(
            num_scalar_prefetch=0,
            grid=(n_grp,),
            in_specs=[
                pl.BlockSpec((T, B_BLK, 2 * in_dim), lambda g: (0, g, 0)),
                # weights: constant index_map -> stay resident across grid steps
                pl.BlockSpec((2 * in_dim, gtot), lambda g: (0, 0)),
                pl.BlockSpec((1, gtot), lambda g: (0, 0)),
                pl.BlockSpec((state, gtot), lambda g: (0, 0)),
                pl.BlockSpec((state, 2 * nz), lambda g: (0, 0)),
                pl.BlockSpec((1, 2 * nz), lambda g: (0, 0)),
                pl.BlockSpec((B_BLK, nz), lambda g: (g, 0)),
            ],
            out_specs=pl.BlockSpec((B_BLK, OUT_W), lambda g: (g, 0)),
        ),
        compiler_params=pltpu.CompilerParams(
            dimension_semantics=("parallel",)),   # shards batch groups on v7x's 2 TCs
    )(xc, wih, bih, whh, whead, bhead, noise_p)

    z = out[:B, 0:nz]
    mu = out[:B, nz:2 * nz]
    sigma_hat = out[:B, 2 * nz:3 * nz]
    return z, mu, sigma_hat


def encoder_forward_ref(inputs, params, noise):
    """Pure-JAX reference (mirrors PyTorch LSTM + Linear semantics)."""
    T, B, _ = inputs.shape
    H = ENC_HIDDEN

    def run_dir(wih, whh, b, xs):
        def step(carry, x_t):
            h, c = carry
            gates = x_t @ wih + h @ whh + b
            i = jax.nn.sigmoid(gates[:, 0:H])
            f = jax.nn.sigmoid(gates[:, H:2 * H])
            g = jnp.tanh(gates[:, 2 * H:3 * H])
            o = jax.nn.sigmoid(gates[:, 3 * H:4 * H])
            c = f * c + i * g
            h = o * jnp.tanh(c)
            return (h, c), None

        (h, _), _ = jax.lax.scan(step, (jnp.zeros((B, H)), jnp.zeros((B, H))), xs)
        return h

    h_fwd = run_dir(params["wih_f"], params["whh_f"], params["b_f"], inputs)
    h_bwd = run_dir(params["wih_b"], params["whh_b"], params["b_b"], inputs[::-1])
    h_cat = jnp.concatenate([h_fwd, h_bwd], axis=1)
    mu = h_cat @ params["wmu"] + params["bmu"]
    sigma_hat = h_cat @ params["wsig"] + params["bsig"]
    sigma = jnp.exp(sigma_hat / 2.0)
    z = mu + sigma * noise
    return z, mu, sigma_hat


if __name__ == "__main__":
    key = jax.random.PRNGKey(0)
    k_param, k_x, k_noise = jax.random.split(key, 3)

    params = init_params(k_param)
    # Stroke-5 style input: [T, B, 5]
    inputs = jax.random.normal(k_x, (SEQ_LEN, BATCH, INPUT_DIM), jnp.float32)
    # Reparameterization noise N ~ Normal(0, 1), same role as torch.normal(...)
    noise = jax.random.normal(k_noise, (BATCH, NZ), jnp.float32)

    z, mu, sigma_hat = encoder_forward(inputs, params, noise)
    jax.block_until_ready((z, mu, sigma_hat))

    z_r, mu_r, sh_r = encoder_forward_ref(inputs, params, noise)
    assert jnp.allclose(z, z_r, atol=1e-4, rtol=1e-4)
    assert jnp.allclose(mu, mu_r, atol=1e-4, rtol=1e-4)
    assert jnp.allclose(sigma_hat, sh_r, atol=1e-4, rtol=1e-4)

    print("KERNEL_OK")
</pallas_src>

<mosaic_0001>
module attributes {stable_mosaic.version = 11 : i64} {
  func.func @_encoder_kernel(%arg0: i32, %arg1: memref<8x8x10xf32, #tpu.memory_space<vmem>>, %arg2: memref<10x512xf32, #tpu.memory_space<vmem>>, %arg3: memref<1x512xf32, #tpu.memory_space<vmem>>, %arg4: memref<128x512xf32, #tpu.memory_space<vmem>>, %arg5: memref<128x32xf32, #tpu.memory_space<vmem>>, %arg6: memref<1x32xf32, #tpu.memory_space<vmem>>, %arg7: memref<8x16xf32, #tpu.memory_space<vmem>>, %arg8: memref<8x128xf32, #tpu.memory_space<vmem>>) attributes {dimension_semantics = [#tpu.dimension_semantics<parallel>], iteration_bounds = array<i64: 2>, scalar_prefetch = 0 : i64, scratch_operands = 0 : i64, tpu.core_type = #tpu.core_type<tc>, window_params = [{transform_indices = @transform_0, window_bounds = array<i64: 8, 8, 10>}, {pipeline_mode = #tpu.pipeline_mode<synchronous>, transform_indices = @transform_1, window_bounds = array<i64: 10, 512>}, {pipeline_mode = #tpu.pipeline_mode<synchronous>, transform_indices = @transform_2, window_bounds = array<i64: 1, 512>}, {pipeline_mode = #tpu.pipeline_mode<synchronous>, transform_indices = @transform_3, window_bounds = array<i64: 128, 512>}, {pipeline_mode = #tpu.pipeline_mode<synchronous>, transform_indices = @transform_4, window_bounds = array<i64: 128, 32>}, {pipeline_mode = #tpu.pipeline_mode<synchronous>, transform_indices = @transform_5, window_bounds = array<i64: 1, 32>}, {transform_indices = @transform_6, window_bounds = array<i64: 8, 16>}, {transform_indices = @transform_7, window_bounds = array<i64: 8, 128>}]} {
    %c0 = arith.constant 0 : index
    %c0_0 = arith.constant 0 : index
    %c0_1 = arith.constant 0 : index
    %0 = vector.load %arg1[%c0, %c0_0, %c0_1] : memref<8x8x10xf32, #tpu.memory_space<vmem>>, vector<8x8x10xf32>
    %1 = vector.shape_cast %0 : vector<8x8x10xf32> to vector<64x10xf32>
    %c0_2 = arith.constant 0 : index
    %c0_3 = arith.constant 0 : index
    %2 = vector.load %arg2[%c0_2, %c0_3] : memref<10x512xf32, #tpu.memory_space<vmem>>, vector<10x512xf32>
    %cst = arith.constant dense<0.000000e+00> : vector<64x512xf32>
    %3 = tpu.matmul %1, %2, %cst {dimension_numbers = #tpu.dot_dimension_numbers<[1], [0], [0], [1], [0, 0, 1, 1], [], []>} : vector<64x10xf32>, vector<10x512xf32>, vector<64x512xf32> -> vector<64x512xf32>
    %c0_4 = arith.constant 0 : index
    %c0_5 = arith.constant 0 : index
    %4 = vector.load %arg3[%c0_4, %c0_5] : memref<1x512xf32, #tpu.memory_space<vmem>>, vector<1x512xf32>
    %5 = vector.broadcast %4 : vector<1x512xf32> to vector<64x512xf32>
    %6 = arith.addf %3, %5 : vector<64x512xf32>
    %7 = vector.shape_cast %6 : vector<64x512xf32> to vector<8x8x512xf32>
    %c0_6 = arith.constant 0 : index
    %c0_7 = arith.constant 0 : index
    %8 = vector.load %arg4[%c0_6, %c0_7] : memref<128x512xf32, #tpu.memory_space<vmem>>, vector<128x512xf32>
    %cst_8 = arith.constant 0.000000e+00 : f32
    %9 = vector.broadcast %cst_8 : f32 to vector<8x128xf32>
    %cst_9 = arith.constant 0.000000e+00 : f32
    %10 = vector.broadcast %cst_9 : f32 to vector<8x128xf32>
    %11 = vector.extract_strided_slice %7 {offsets = [0, 0, 0], sizes = [1, 8, 512], strides = [1, 1, 1]} : vector<8x8x512xf32> to vector<1x8x512xf32>
    %12 = vector.shape_cast %11 : vector<1x8x512xf32> to vector<8x512xf32>
    %cst_10 = arith.constant dense<0.000000e+00> : vector<8x512xf32>
    %13 = tpu.matmul %9, %8, %cst_10 {dimension_numbers = #tpu.dot_dimension_numbers<[1], [0], [0], [1], [0, 0, 1, 1], [], []>} : vector<8x128xf32>, vector<128x512xf32>, vector<8x512xf32> -> vector<8x512xf32>
    %14 = arith.addf %12, %13 : vector<8x512xf32>
    %15 = vector.extract_strided_slice %14 {offsets = [0, 0], sizes = [8, 384], strides = [1, 1]} : vector<8x512xf32> to vector<8x384xf32>
    %16 = arith.negf %15 : vector<8x384xf32>
    %17 = math.exp %16 : vector<8x384xf32>
    %cst_11 = arith.constant 1.000000e+00 : f32
    %18 = vector.broadcast %cst_11 : f32 to vector<8x384xf32>
    %19 = arith.addf %18, %17 : vector<8x384xf32>
    %20 = arith.divf %18, %19 : vector<8x384xf32>
    %21 = vector.extract_strided_slice %14 {offsets = [0, 384], sizes = [8, 128], strides = [1, 1]} : vector<8x512xf32> to vector<8x128xf32>
    %22 = math.tanh %21 : vector<8x128xf32>
    %23 = vector.extract_strided_slice %20 {offsets = [0, 0], sizes = [8, 128], strides = [1, 1]} : vector<8x384xf32> to vector<8x128xf32>
    %24 = vector.extract_strided_slice %20 {offsets = [0, 128], sizes = [8, 128], strides = [1, 1]} : vector<8x384xf32> to vector<8x128xf32>
    %25 = vector.extract_strided_slice %20 {offsets = [0, 256], sizes = [8, 128], strides = [1, 1]} : vector<8x384xf32> to vector<8x128xf32>
    %26 = arith.mulf %24, %10 : vector<8x128xf32>
    %27 = arith.mulf %23, %22 : vector<8x128xf32>
    %28 = arith.addf %26, %27 : vector<8x128xf32>
    %29 = math.tanh %28 : vector<8x128xf32>
    %30 = arith.mulf %25, %29 : vector<8x128xf32>
    %31 = vector.extract_strided_slice %7 {offsets = [1, 0, 0], sizes = [1, 8, 512], strides = [1, 1, 1]} : vector<8x8x512xf32> to vector<1x8x512xf32>
    %32 = vector.shape_cast %31 : vector<1x8x512xf32> to vector<8x512xf32>
    %cst_12 = arith.constant dense<0.000000e+00> : vector<8x512xf32>
    %33 = tpu.matmul %30, %8, %cst_12 {dimension_numbers = #tpu.dot_dimension_numbers<[1], [0], [0], [1], [0, 0, 1, 1], [], []>} : vector<8x128xf32>, vector<128x512xf32>, vector<8x512xf32> -> vector<8x512xf32>
    %34 = arith.addf %32, %33 : vector<8x512xf32>
    %35 = vector.extract_strided_slice %34 {offsets = [0, 0], sizes = [8, 384], strides = [1, 1]} : vector<8x512xf32> to vector<8x384xf32>
    %36 = arith.negf %35 : vector<8x384xf32>
    %37 = math.exp %36 : vector<8x384xf32>
    %cst_13 = arith.constant 1.000000e+00 : f32
    %38 = vector.broadcast %cst_13 : f32 to vector<8x384xf32>
    %39 = arith.addf %38, %37 : vector<8x384xf32>
    %40 = arith.divf %38, %39 : vector<8x384xf32>
    %41 = vector.extract_strided_slice %34 {offsets = [0, 384], sizes = [8, 128], strides = [1, 1]} : vector<8x512xf32> to vector<8x128xf32>
    %42 = math.tanh %41 : vector<8x128xf32>
    %43 = vector.extract_strided_slice %40 {offsets = [0, 0], sizes = [8, 128], strides = [1, 1]} : vector<8x384xf32> to vector<8x128xf32>
    %44 = vector.extract_strided_slice %40 {offsets = [0, 128], sizes = [8, 128], strides = [1, 1]} : vector<8x384xf32> to vector<8x128xf32>
    %45 = vector.extract_strided_slice %40 {offsets = [0, 256], sizes = [8, 128], strides = [1, 1]} : vector<8x384xf32> to vector<8x128xf32>
    %46 = arith.mulf %44, %28 : vector<8x128xf32>
    %47 = arith.mulf %43, %42 : vector<8x128xf32>
    %48 = arith.addf %46, %47 : vector<8x128xf32>
    %49 = math.tanh %48 : vector<8x128xf32>
    %50 = arith.mulf %45, %49 : vector<8x128xf32>
    %51 = vector.extract_strided_slice %7 {offsets = [2, 0, 0], sizes = [1, 8, 512], strides = [1, 1, 1]} : vector<8x8x512xf32> to vector<1x8x512xf32>
    %52 = vector.shape_cast %51 : vector<1x8x512xf32> to vector<8x512xf32>
    %cst_14 = arith.constant dense<0.000000e+00> : vector<8x512xf32>
    %53 = tpu.matmul %50, %8, %cst_14 {dimension_numbers = #tpu.dot_dimension_numbers<[1], [0], [0], [1], [0, 0, 1, 1], [], []>} : vector<8x128xf32>, vector<128x512xf32>, vector<8x512xf32> -> vector<8x512xf32>
    %54 = arith.addf %52, %53 : vector<8x512xf32>
    %55 = vector.extract_strided_slice %54 {offsets = [0, 0], sizes = [8, 384], strides = [1, 1]} : vector<8x512xf32> to vector<8x384xf32>
    %56 = arith.negf %55 : vector<8x384xf32>
    %57 = math.exp %56 : vector<8x384xf32>
    %cst_15 = arith.constant 1.000000e+00 : f32
    %58 = vector.broadcast %cst_15 : f32 to vector<8x384xf32>
    %59 = arith.addf %58, %57 : vector<8x384xf32>
    %60 = arith.divf %58, %59 : vector<8x384xf32>
    %61 = vector.extract_strided_slice %54 {offsets = [0, 384], sizes = [8, 128], strides = [1, 1]} : vector<8x512xf32> to vector<8x128xf32>
    %62 = math.tanh %61 : vector<8x128xf32>
    %63 = vector.extract_strided_slice %60 {offsets = [0, 0], sizes = [8, 128], strides = [1, 1]} : vector<8x384xf32> to vector<8x128xf32>
    %64 = vector.extract_strided_slice %60 {offsets = [0, 128], sizes = [8, 128], strides = [1, 1]} : vector<8x384xf32> to vector<8x128xf32>
    %65 = vector.extract_strided_slice %60 {offsets = [0, 256], sizes = [8, 128], strides = [1, 1]} : vector<8x384xf32> to vector<8x128xf32>
    %66 = arith.mulf %64, %48 : vector<8x128xf32>
    %67 = arith.mulf %63, %62 : vector<8x128xf32>
    %68 = arith.addf %66, %67 : vector<8x128xf32>
    %69 = math.tanh %68 : vector<8x128xf32>
    %70 = arith.mulf %65, %69 : vector<8x128xf32>
    %71 = vector.extract_strided_slice %7 {offsets = [3, 0, 0], sizes = [1, 8, 512], strides = [1, 1, 1]} : vector<8x8x512xf32> to vector<1x8x512xf32>
    %72 = vector.shape_cast %71 : vector<1x8x512xf32> to vector<8x512xf32>
    %cst_16 = arith.constant dense<0.000000e+00> : vector<8x512xf32>
    %73 = tpu.matmul %70, %8, %cst_16 {dimension_numbers = #tpu.dot_dimension_numbers<[1], [0], [0], [1], [0, 0, 1, 1], [], []>} : vector<8x128xf32>, vector<128x512xf32>, vector<8x512xf32> -> vector<8x512xf32>
    %74 = arith.addf %72, %73 : vector<8x512xf32>
    %75 = vector.extract_strided_slice %74 {offsets = [0, 0], sizes = [8, 384], strides = [1, 1]} : vector<8x512xf32> to vector<8x384xf32>
    %76 = arith.negf %75 : vector<8x384xf32>
    %77 = math.exp %76 : vector<8x384xf32>
    %cst_17 = arith.constant 1.000000e+00 : f32
    %78 = vector.broadcast %cst_17 : f32 to vector<8x384xf32>
    %79 = arith.addf %78, %77 : vector<8x384xf32>
    %80 = arith.divf %78, %79 : vector<8x384xf32>
    %81 = vector.extract_strided_slice %74 {offsets = [0, 384], sizes = [8, 128], strides = [1, 1]} : vector<8x512xf32> to vector<8x128xf32>
    %82 = math.tanh %81 : vector<8x128xf32>
    %83 = vector.extract_strided_slice %80 {offsets = [0, 0], sizes = [8, 128], strides = [1, 1]} : vector<8x384xf32> to vector<8x128xf32>
    %84 = vector.extract_strided_slice %80 {offsets = [0, 128], sizes = [8, 128], strides = [1, 1]} : vector<8x384xf32> to vector<8x128xf32>
    %85 = vector.extract_strided_slice %80 {offsets = [0, 256], sizes = [8, 128], strides = [1, 1]} : vector<8x384xf32> to vector<8x128xf32>
    %86 = arith.mulf %84, %68 : vector<8x128xf32>
    %87 = arith.mulf %83, %82 : vector<8x128xf32>
    %88 = arith.addf %86, %87 : vector<8x128xf32>
    %89 = math.tanh %88 : vector<8x128xf32>
    %90 = arith.mulf %85, %89 : vector<8x128xf32>
    %91 = vector.extract_strided_slice %7 {offsets = [4, 0, 0], sizes = [1, 8, 512], strides = [1, 1, 1]} : vector<8x8x512xf32> to vector<1x8x512xf32>
    %92 = vector.shape_cast %91 : vector<1x8x512xf32> to vector<8x512xf32>
    %cst_18 = arith.constant dense<0.000000e+00> : vector<8x512xf32>
    %93 = tpu.matmul %90, %8, %cst_18 {dimension_numbers = #tpu.dot_dimension_numbers<[1], [0], [0], [1], [0, 0, 1, 1], [], []>} : vector<8x128xf32>, vector<128x512xf32>, vector<8x512xf32> -> vector<8x512xf32>
    %94 = arith.addf %92, %93 : vector<8x512xf32>
    %95 = vector.extract_strided_slice %94 {offsets = [0, 0], sizes = [8, 384], strides = [1, 1]} : vector<8x512xf32> to vector<8x384xf32>
    %96 = arith.negf %95 : vector<8x384xf32>
    %97 = math.exp %96 : vector<8x384xf32>
    %cst_19 = arith.constant 1.000000e+00 : f32
    %98 = vector.broadcast %cst_19 : f32 to vector<8x384xf32>
    %99 = arith.addf %98, %97 : vector<8x384xf32>
    %100 = arith.divf %98, %99 : vector<8x384xf32>
    %101 = vector.extract_strided_slice %94 {offsets = [0, 384], sizes = [8, 128], strides = [1, 1]} : vector<8x512xf32> to vector<8x128xf32>
    %102 = math.tanh %101 : vector<8x128xf32>
    %103 = vector.extract_strided_slice %100 {offsets = [0, 0], sizes = [8, 128], strides = [1, 1]} : vector<8x384xf32> to vector<8x128xf32>
    %104 = vector.extract_strided_slice %100 {offsets = [0, 128], sizes = [8, 128], strides = [1, 1]} : vector<8x384xf32> to vector<8x128xf32>
    %105 = vector.extract_strided_slice %100 {offsets = [0, 256], sizes = [8, 128], strides = [1, 1]} : vector<8x384xf32> to vector<8x128xf32>
    %106 = arith.mulf %104, %88 : vector<8x128xf32>
    %107 = arith.mulf %103, %102 : vector<8x128xf32>
    %108 = arith.addf %106, %107 : vector<8x128xf32>
    %109 = math.tanh %108 : vector<8x128xf32>
    %110 = arith.mulf %105, %109 : vector<8x128xf32>
    %111 = vector.extract_strided_slice %7 {offsets = [5, 0, 0], sizes = [1, 8, 512], strides = [1, 1, 1]} : vector<8x8x512xf32> to vector<1x8x512xf32>
    %112 = vector.shape_cast %111 : vector<1x8x512xf32> to vector<8x512xf32>
    %cst_20 = arith.constant dense<0.000000e+00> : vector<8x512xf32>
    %113 = tpu.matmul %110, %8, %cst_20 {dimension_numbers = #tpu.dot_dimension_numbers<[1], [0], [0], [1], [0, 0, 1, 1], [], []>} : vector<8x128xf32>, vector<128x512xf32>, vector<8x512xf32> -> vector<8x512xf32>
    %114 = arith.addf %112, %113 : vector<8x512xf32>
    %115 = vector.extract_strided_slice %114 {offsets = [0, 0], sizes = [8, 384], strides = [1, 1]} : vector<8x512xf32> to vector<8x384xf32>
    %116 = arith.negf %115 : vector<8x384xf32>
    %117 = math.exp %116 : vector<8x384xf32>
    %cst_21 = arith.constant 1.000000e+00 : f32
    %118 = vector.broadcast %cst_21 : f32 to vector<8x384xf32>
    %119 = arith.addf %118, %117 : vector<8x384xf32>
    %120 = arith.divf %118, %119 : vector<8x384xf32>
    %121 = vector.extract_strided_slice %114 {offsets = [0, 384], sizes = [8, 128], strides = [1, 1]} : vector<8x512xf32> to vector<8x128xf32>
    %122 = math.tanh %121 : vector<8x128xf32>
    %123 = vector.extract_strided_slice %120 {offsets = [0, 0], sizes = [8, 128], strides = [1, 1]} : vector<8x384xf32> to vector<8x128xf32>
    %124 = vector.extract_strided_slice %120 {offsets = [0, 128], sizes = [8, 128], strides = [1, 1]} : vector<8x384xf32> to vector<8x128xf32>
    %125 = vector.extract_strided_slice %120 {offsets = [0, 256], sizes = [8, 128], strides = [1, 1]} : vector<8x384xf32> to vector<8x128xf32>
    %126 = arith.mulf %124, %108 : vector<8x128xf32>
    %127 = arith.mulf %123, %122 : vector<8x128xf32>
    %128 = arith.addf %126, %127 : vector<8x128xf32>
    %129 = math.tanh %128 : vector<8x128xf32>
    %130 = arith.mulf %125, %129 : vector<8x128xf32>
    %131 = vector.extract_strided_slice %7 {offsets = [6, 0, 0], sizes = [1, 8, 512], strides = [1, 1, 1]} : vector<8x8x512xf32> to vector<1x8x512xf32>
    %132 = vector.shape_cast %131 : vector<1x8x512xf32> to vector<8x512xf32>
    %cst_22 = arith.constant dense<0.000000e+00> : vector<8x512xf32>
    %133 = tpu.matmul %130, %8, %cst_22 {dimension_numbers = #tpu.dot_dimension_numbers<[1], [0], [0], [1], [0, 0, 1, 1], [], []>} : vector<8x128xf32>, vector<128x512xf32>, vector<8x512xf32> -> vector<8x512xf32>
    %134 = arith.addf %132, %133 : vector<8x512xf32>
    %135 = vector.extract_strided_slice %134 {offsets = [0, 0], sizes = [8, 384], strides = [1, 1]} : vector<8x512xf32> to vector<8x384xf32>
    %136 = arith.negf %135 : vector<8x384xf32>
    %137 = math.exp %136 : vector<8x384xf32>
    %cst_23 = arith.constant 1.000000e+00 : f32
    %138 = vector.broadcast %cst_23 : f32 to vector<8x384xf32>
    %139 = arith.addf %138, %137 : vector<8x384xf32>
    %140 = arith.divf %138, %139 : vector<8x384xf32>
    %141 = vector.extract_strided_slice %134 {offsets = [0, 384], sizes = [8, 128], strides = [1, 1]} : vector<8x512xf32> to vector<8x128xf32>
    %142 = math.tanh %141 : vector<8x128xf32>
    %143 = vector.extract_strided_slice %140 {offsets = [0, 0], sizes = [8, 128], strides = [1, 1]} : vector<8x384xf32> to vector<8x128xf32>
    %144 = vector.extract_strided_slice %140 {offsets = [0, 128], sizes = [8, 128], strides = [1, 1]} : vector<8x384xf32> to vector<8x128xf32>
    %145 = vector.extract_strided_slice %140 {offsets = [0, 256], sizes = [8, 128], strides = [1, 1]} : vector<8x384xf32> to vector<8x128xf32>
    %146 = arith.mulf %144, %128 : vector<8x128xf32>
    %147 = arith.mulf %143, %142 : vector<8x128xf32>
    %148 = arith.addf %146, %147 : vector<8x128xf32>
    %149 = math.tanh %148 : vector<8x128xf32>
    %150 = arith.mulf %145, %149 : vector<8x128xf32>
    %151 = vector.extract_strided_slice %7 {offsets = [7, 0, 0], sizes = [1, 8, 512], strides = [1, 1, 1]} : vector<8x8x512xf32> to vector<1x8x512xf32>
    %152 = vector.shape_cast %151 : vector<1x8x512xf32> to vector<8x512xf32>
    %cst_24 = arith.constant dense<0.000000e+00> : vector<8x512xf32>
    %153 = tpu.matmul %150, %8, %cst_24 {dimension_numbers = #tpu.dot_dimension_numbers<[1], [0], [0], [1], [0, 0, 1, 1], [], []>} : vector<8x128xf32>, vector<128x512xf32>, vector<8x512xf32> -> vector<8x512xf32>
    %154 = arith.addf %152, %153 : vector<8x512xf32>
    %155 = vector.extract_strided_slice %154 {offsets = [0, 0], sizes = [8, 384], strides = [1, 1]} : vector<8x512xf32> to vector<8x384xf32>
    %156 = arith.negf %155 : vector<8x384xf32>
    %157 = math.exp %156 : vector<8x384xf32>
    %cst_25 = arith.constant 1.000000e+00 : f32
    %158 = vector.broadcast %cst_25 : f32 to vector<8x384xf32>
    %159 = arith.addf %158, %157 : vector<8x384xf32>
    %160 = arith.divf %158, %159 : vector<8x384xf32>
    %161 = vector.extract_strided_slice %154 {offsets = [0, 384], sizes = [8, 128], strides = [1, 1]} : vector<8x512xf32> to vector<8x128xf32>
    %162 = math.tanh %161 : vector<8x128xf32>
    %163 = vector.extract_strided_slice %160 {offsets = [0, 0], sizes = [8, 128], strides = [1, 1]} : vector<8x384xf32> to vector<8x128xf32>
    %164 = vector.extract_strided_slice %160 {offsets = [0, 128], sizes = [8, 128], strides = [1, 1]} : vector<8x384xf32> to vector<8x128xf32>
    %165 = vector.extract_strided_slice %160 {offsets = [0, 256], sizes = [8, 128], strides = [1, 1]} : vector<8x384xf32> to vector<8x128xf32>
    %166 = arith.mulf %164, %148 : vector<8x128xf32>
    %167 = arith.mulf %163, %162 : vector<8x128xf32>
    %168 = arith.addf %166, %167 : vector<8x128xf32>
    %169 = math.tanh %168 : vector<8x128xf32>
    %170 = arith.mulf %165, %169 : vector<8x128xf32>
    %c0_26 = arith.constant 0 : index
    %c0_27 = arith.constant 0 : index
    %171 = vector.load %arg5[%c0_26, %c0_27] : memref<128x32xf32, #tpu.memory_space<vmem>>, vector<128x32xf32>
    %cst_28 = arith.constant dense<0.000000e+00> : vector<8x32xf32>
    %172 = tpu.matmul %170, %171, %cst_28 {dimension_numbers = #tpu.dot_dimension_numbers<[1], [0], [0], [1], [0, 0, 1, 1], [], []>} : vector<8x128xf32>, vector<128x32xf32>, vector<8x32xf32> -> vector<8x32xf32>
    %c0_29 = arith.constant 0 : index
    %c0_30 = arith.constant 0 : index
    %173 = vector.load %arg6[%c0_29, %c0_30] : memref<1x32xf32, #tpu.memory_space<vmem>>, vector<1x32xf32>
    %174 = vector.broadcast %173 : vector<1x32xf32> to vector<8x32xf32>
    %175 = arith.addf %172, %174 : vector<8x32xf32>
    %176 = vector.extract_strided_slice %175 {offsets = [0, 0], sizes = [8, 16], strides = [1, 1]} : vector<8x32xf32> to vector<8x16xf32>
    %177 = vector.extract_strided_slice %175 {offsets = [0, 16], sizes = [8, 16], strides = [1, 1]} : vector<8x32xf32> to vector<8x16xf32>
    %cst_31 = arith.constant 5.000000e-01 : f32
    %178 = vector.broadcast %cst_31 : f32 to vector<8x16xf32>
    %179 = arith.mulf %177, %178 : vector<8x16xf32>
    %180 = math.exp %179 : vector<8x16xf32>
    %c0_32 = arith.constant 0 : index
    %c0_33 = arith.constant 0 : index
    %181 = vector.load %arg7[%c0_32, %c0_33] : memref<8x16xf32, #tpu.memory_space<vmem>>, vector<8x16xf32>
    %182 = arith.mulf %180, %181 : vector<8x16xf32>
    %183 = arith.addf %176, %182 : vector<8x16xf32>
    %cst_34 = arith.constant 0.000000e+00 : f32
    %184 = vector.broadcast %cst_34 : f32 to vector<8x80xf32>
    %185 = tpu.concatenate %183, %176, %177, %184 in 1 : vector<8x16xf32>, vector<8x16xf32>, vector<8x16xf32>, vector<8x80xf32> -> vector<8x128xf32>
    %c0_35 = arith.constant 0 : index
    %c0_36 = arith.constant 0 : index
    %186 = vector.load %arg8[%c0_35, %c0_36] : memref<8x128xf32, #tpu.memory_space<vmem>>, vector<8x128xf32>
    tpu.vector_store %arg8[%c0_35, %c0_36], %185 {strides = array<i32>} : memref<8x128xf32, #tpu.memory_space<vmem>>, vector<8x128xf32>,
    return
  }
  func.func @transform_0(%arg0: i32) -> (i32, i32, i32) {
    %c0_i32 = arith.constant 0 : i32
    %c0_i32_0 = arith.constant 0 : i32
    %c0_i32_1 = arith.constant 0 : i32
    return %c0_i32, %arg0, %c0_i32_0 : i32, i32, i32
  }
  func.func @transform_1(%arg0: i32) -> (i32, i32) {
    %c0_i32 = arith.constant 0 : i32
    %c0_i32_0 = arith.constant 0 : i32
    %c0_i32_1 = arith.constant 0 : i32
    return %c0_i32, %c0_i32_0 : i32, i32
  }
  func.func @transform_2(%arg0: i32) -> (i32, i32) {
    %c0_i32 = arith.constant 0 : i32
    %c0_i32_0 = arith.constant 0 : i32
    %c0_i32_1 = arith.constant 0 : i32
    return %c0_i32, %c0_i32_0 : i32, i32
  }
  func.func @transform_3(%arg0: i32) -> (i32, i32) {
    %c0_i32 = arith.constant 0 : i32
    %c0_i32_0 = arith.constant 0 : i32
    %c0_i32_1 = arith.constant 0 : i32
    return %c0_i32, %c0_i32_0 : i32, i32
  }
  func.func @transform_4(%arg0: i32) -> (i32, i32) {
    %c0_i32 = arith.constant 0 : i32
    %c0_i32_0 = arith.constant 0 : i32
    %c0_i32_1 = arith.constant 0 : i32
    return %c0_i32, %c0_i32_0 : i32, i32
  }
  func.func @transform_5(%arg0: i32) -> (i32, i32) {
    %c0_i32 = arith.constant 0 : i32
    %c0_i32_0 = arith.constant 0 : i32
    %c0_i32_1 = arith.constant 0 : i32
    return %c0_i32, %c0_i32_0 : i32, i32
  }
  func.func @transform_6(%arg0: i32) -> (i32, i32) {
    %c0_i32 = arith.constant 0 : i32
    %c0_i32_0 = arith.constant 0 : i32
    return %arg0, %c0_i32 : i32, i32
  }
  func.func @transform_7(%arg0: i32) -> (i32, i32) {
    %c0_i32 = arith.constant 0 : i32
    %c0_i32_0 = arith.constant 0 : i32
    return %arg0, %c0_i32 : i32, i32
  }
}

</mosaic_0001>

<llo_original>
// kernel: encoder_forward.1
$region0: #{encoder_forward.1}
  #allocation0 [shape = 'u32[]', space=smem, size = 0x4, offset = 0x4, fixed_abs, tag = 'smem constant byte address 0x4 - core index']
  #allocation1 [shape = 'u32[72,128]{1,0:T(1,128)}', space=vmem, size = 0x9000, scoped, tag = 'internal scratch']
  %s0 = inlined_call_operand.vmem [shape: f32[8,16,10], index: 0, kind: input, shape index: {}]
  %s1 = inlined_call_operand.vmem [shape: f32[10,512], index: 1, kind: input, shape index: {}]
  %s2 = inlined_call_operand.vmem [shape: f32[1,512], index: 2, kind: input, shape index: {}]
  %s3 = inlined_call_operand.vmem [shape: f32[128,512], index: 3, kind: input, shape index: {}]
  %s4 = inlined_call_operand.vmem [shape: f32[128,32], index: 4, kind: input, shape index: {}]
  %s5 = inlined_call_operand.vmem [shape: f32[1,32], index: 5, kind: input, shape index: {}]
  %s6 = inlined_call_operand.vmem [shape: f32[16,16], index: 6, kind: input, shape index: {}]
  %s7 = inlined_call_operand.vmem [shape: f32[16,128], index: 7, kind: output, shape index: {}]
  %s8 = sld [smem:[#allocation0]]
  $region99: #{encoder_forward.1} parent=0
    _
  %s10 = ssub.s32 1, %s8
  %s11 = scalar_select 0, %s10, %s8
  $region1: #{encoder_forward.1} parent=0
    #allocation2 [shape = 'u8[65536]{0}', space=vmem, size = 0x10000, scoped, tag = 'input window, operand 0']
    loop: start=0, step=1, limit=4
    $region2: #{encoder_forward.1} parent=1 // loop_pre_header
      _
    $region3: #{encoder_forward.1} parent=1 // loop_header
      %s13 = sphi 0, %s17
      %p14 = scmp.ge.s32.totalorder %s13, 4
      %s23 = sphi 0, %s25
      %s26 = sphi 0, %s23
      %s27 = sphi 0, %s26
      %s43 = sphi 0, %s27
      %s47 = sphi 0, %s47
      %s49 = sphi 0, %s47
      %s50 = sphi 0, %s49
      %s64 = sphi 0, %s50
      %s68 = sphi 0, %s68
      %s70 = sphi 0, %s68
      %s71 = sphi 0, %s70
      %s85 = sphi 0, %s71
      %s89 = sphi 0, %s89
      %s91 = sphi 0, %s89
      %s92 = sphi 0, %s91
      %s106 = sphi 0, %s92
      %s110 = sphi 0, %s110
      %s112 = sphi 0, %s110
      %s113 = sphi 0, %s112
      %s127 = sphi 0, %s113
      %s131 = sphi 0, %s131
      %s133 = sphi 0, %s131
      %s134 = sphi 0, %s133
      %s148 = sphi 0, %s134
      %s154 = sphi 0, %s156
      %s157 = sphi 0, %s154
      %s158 = sphi 0, %s157
      %s174 = sphi 0, %s158
      %s180 = sphi 0, %s182
      %s183 = sphi 0, %s180
      %s184 = sphi 0, %s183
      %s200 = sphi 0, %s184
    $region4: #{encoder_forward.1} parent=1 // loop_header_branch
      %16 = sbr.rel (%p14) target = $region8
    $region5: #{encoder_forward.1} parent=1 // loop_body
      %s18 = ssub.s32 %s13, 1
      %s19 = ssub.s32 %s13, 2
      %s20 = sadd.s32 %s13, 1
      %s21 = ssub.s32 %s13, %s20
      %p22 = scmp.eq.s32.totalorder %s21, 0
      %s24 = sadd.s32 %s23, 1
      %s25 = scalar_select %p22, %s23, %s24
      %p28 = pneg %p22
      %p29 = scmp.eq.s32.totalorder %s13, 1
      %p30 = por %p28, %p29
      %p31 = scmp.ne.s32.totalorder %s23, %s26
      %p32 = scmp.eq.s32.totalorder %s13, 0
      %p33 = por %p31, %p32
      %p34 = scmp.ne.s32.totalorder %s23, %s26
      %p35 = scmp.eq.s32.totalorder %s18, 1
      %p36 = por %p34, %p35
      %p37 = scmp.ne.s32.totalorder %s26, %s27
      %p38 = scmp.eq.s32.totalorder %s18, 0
      %p39 = por %p37, %p38
      %p40 = scmp.ne.s32.totalorder %s26, %s27
      %p41 = scmp.eq.s32.totalorder %s19, 1
      %p42 = por %p40, %p41
      %p44 = scmp.ne.s32.totalorder %s27, %s43
      %p45 = scmp.eq.s32.totalorder %s19, 0
      %p46 = por %p44, %p45
      %s48 = sadd.s32 %s47, 1
      %p51 = scmp.eq.s32.totalorder %s13, 1
      %p52 = scmp.ne.s32.totalorder %s47, %s49
      %p53 = scmp.eq.s32.totalorder %s13, 0
      %p54 = por %p52, %p53
      %p55 = scmp.ne.s32.totalorder %s47, %s49
      %p56 = scmp.eq.s32.totalorder %s18, 1
      %p57 = por %p55, %p56
      %p58 = scmp.ne.s32.totalorder %s49, %s50
      %p59 = scmp.eq.s32.totalorder %s18, 0
      %p60 = por %p58, %p59
      %p61 = scmp.ne.s32.totalorder %s49, %s50
      %p62 = scmp.eq.s32.totalorder %s19, 1
      %p63 = por %p61, %p62
      %p65 = scmp.ne.s32.totalorder %s50, %s64
      %p66 = scmp.eq.s32.totalorder %s19, 0
      %p67 = por %p65, %p66
      %s69 = sadd.s32 %s68, 1
      %p72 = scmp.eq.s32.totalorder %s13, 1
      %p73 = scmp.ne.s32.totalorder %s68, %s70
      %p74 = scmp.eq.s32.totalorder %s13, 0
      %p75 = por %p73, %p74
      %p76 = scmp.ne.s32.totalorder %s68, %s70
      %p77 = scmp.eq.s32.totalorder %s18, 1
      %p78 = por %p76, %p77
      %p79 = scmp.ne.s32.totalorder %s70, %s71
      %p80 = scmp.eq.s32.totalorder %s18, 0
      %p81 = por %p79, %p80
      %p82 = scmp.ne.s32.totalorder %s70, %s71
      %p83 = scmp.eq.s32.totalorder %s19, 1
      %p84 = por %p82, %p83
      %p86 = scmp.ne.s32.totalorder %s71, %s85
      %p87 = scmp.eq.s32.totalorder %s19, 0
      %p88 = por %p86, %p87
      %s90 = sadd.s32 %s89, 1
      %p93 = scmp.eq.s32.totalorder %s13, 1
      %p94 = scmp.ne.s32.totalorder %s89, %s91
      %p95 = scmp.eq.s32.totalorder %s13, 0
      %p96 = por %p94, %p95
      %p97 = scmp.ne.s32.totalorder %s89, %s91
      %p98 = scmp.eq.s32.totalorder %s18, 1
      %p99 = por %p97, %p98
      %p100 = scmp.ne.s32.totalorder %s91, %s92
      %p101 = scmp.eq.s32.totalorder %s18, 0
      %p102 = por %p100, %p101
      %p103 = scmp.ne.s32.totalorder %s91, %s92
      %p104 = scmp.eq.s32.totalorder %s19, 1
      %p105 = por %p103, %p104
      %p107 = scmp.ne.s32.totalorder %s92, %s106
      %p108 = scmp.eq.s32.totalorder %s19, 0
      %p109 = por %p107, %p108
      %s111 = sadd.s32 %s110, 1
      %p114 = scmp.eq.s32.totalorder %s13, 1
      %p115 = scmp.ne.s32.totalorder %s110, %s112
      %p116 = scmp.eq.s32.totalorder %s13, 0
      %p117 = por %p115, %p116
      %p118 = scmp.ne.s32.totalorder %s110, %s112
      %p119 = scmp.eq.s32.totalorder %s18, 1
      %p120 = por %p118, %p119
      %p121 = scmp.ne.s32.totalorder %s112, %s113
      %p122 = scmp.eq.s32.totalorder %s18, 0
      %p123 = por %p121, %p122
      %p124 = scmp.ne.s32.totalorder %s112, %s113
      %p125 = scmp.eq.s32.totalorder %s19, 1
      %p126 = por %p124, %p125
      %p128 = scmp.ne.s32.totalorder %s113, %s127
      %p129 = scmp.eq.s32.totalorder %s19, 0
      %p130 = por %p128, %p129
      %s132 = sadd.s32 %s131, 1
      %p135 = scmp.eq.s32.totalorder %s13, 1
      %p136 = scmp.ne.s32.totalorder %s131, %s133
      %p137 = scmp.eq.s32.totalorder %s13, 0
      %p138 = por %p136, %p137
      %p139 = scmp.ne.s32.totalorder %s131, %s133
      %p140 = scmp.eq.s32.totalorder %s18, 1
      %p141 = por %p139, %p140
      %p142 = scmp.ne.s32.totalorder %s133, %s134
      %p143 = scmp.eq.s32.totalorder %s18, 0
      %p144 = por %p142, %p143
      %p145 = scmp.ne.s32.totalorder %s133, %s134
      %p146 = scmp.eq.s32.totalorder %s19, 1
      %p147 = por %p145, %p146
      %p149 = scmp.ne.s32.totalorder %s134, %s148
      %p150 = scmp.eq.s32.totalorder %s19, 0
      %p151 = por %p149, %p150
      %s152 = ssub.s32 %s13, %s20
      %p153 = scmp.eq.s32.totalorder %s152, 0
      %s155 = sadd.s32 %s154, 1
      %s156 = scalar_select %p153, %s154, %s155
      %p159 = pneg %p153
      %p160 = scmp.eq.s32.totalorder %s13, 1
      %p161 = por %p159, %p160
      %p162 = scmp.ne.s32.totalorder %s154, %s157
      %p163 = scmp.eq.s32.totalorder %s13, 0
      %p164 = por %p162, %p163
      %p165 = scmp.ne.s32.totalorder %s154, %s157
      %p166 = scmp.eq.s32.totalorder %s18, 1
      %p167 = por %p165, %p166
      %p168 = scmp.ne.s32.totalorder %s157, %s158
      %p169 = scmp.eq.s32.totalorder %s18, 0
      %p170 = por %p168, %p169
      %p171 = scmp.ne.s32.totalorder %s157, %s158
      %p172 = scmp.eq.s32.totalorder %s19, 1
      %p173 = por %p171, %p172
      %p175 = scmp.ne.s32.totalorder %s158, %s174
      %p176 = scmp.eq.s32.totalorder %s19, 0
      %p177 = por %p175, %p176
      %s178 = ssub.s32 %s13, %s20
      %p179 = scmp.eq.s32.totalorder %s178, 0
      %s181 = sadd.s32 %s180, 1
      %s182 = scalar_select %p179, %s180, %s181
      %p185 = pneg %p179
      %p186 = scmp.eq.s32.totalorder %s13, 1
      %p187 = por %p185, %p186
      %p188 = scmp.ne.s32.totalorder %s180, %s183
      %p189 = scmp.eq.s32.totalorder %s13, 0
      %p190 = por %p188, %p189
      %p191 = scmp.ne.s32.totalorder %s180, %s183
      %p192 = scmp.eq.s32.totalorder %s18, 1
      %p193 = por %p191, %p192
      %p194 = scmp.ne.s32.totalorder %s183, %s184
      %p195 = scmp.eq.s32.totalorder %s18, 0
      %p196 = por %p194, %p195
      %p197 = scmp.ne.s32.totalorder %s183, %s184
      %p198 = scmp.eq.s32.totalorder %s19, 1
      %p199 = por %p197, %p198
      %p201 = scmp.ne.s32.totalorder %s184, %s200
      %p202 = scmp.eq.s32.totalorder %s19, 0
      %p203 = por %p201, %p202
      %p204 = scmp.le.s32.totalorder 1, %s13
      %p205 = scmp.lt.s32.totalorder %s13, 3
      %p206 = pnand %p204, %p205
      %p207 = pneg %p206
      // Predicated region
      $region9: #{encoder_forward.1} parent=5 // pred_check
        _
      $region10: #{encoder_forward.1} parent=5 // pred_check_branch
        %209 = sbr.rel (%p206) target = $region12
      $region11: #{encoder_forward.1} parent=5 // pred_region
        %s210 = ssub.s32 %s13, 1
        // Predicated region
        $region13: #{encoder_forward.1} parent=11 // pred_check
          %p211 = pneg %p60
        $region14: #{encoder_forward.1} parent=11 // pred_check_branch
          %213 = sbr.rel (%p211) target = $region16
        $region15: #{encoder_forward.1} parent=11 // pred_region
          _
        $region16: #{encoder_forward.1} parent=11 // pred_fallthru
          _
        // Predicated region
        $region17: #{encoder_forward.1} parent=11 // pred_check
          %p214 = pneg %p81
        $region18: #{encoder_forward.1} parent=11 // pred_check_branch
          %216 = sbr.rel (%p214) target = $region20
        $region19: #{encoder_forward.1} parent=11 // pred_region
          _
        $region20: #{encoder_forward.1} parent=11 // pred_fallthru
          _
        // Predicated region
        $region21: #{encoder_forward.1} parent=11 // pred_check
          %p217 = pneg %p102
        $region22: #{encoder_forward.1} parent=11 // pred_check_branch
          %219 = sbr.rel (%p217) target = $region24
        $region23: #{encoder_forward.1} parent=11 // pred_region
          _
        $region24: #{encoder_forward.1} parent=11 // pred_fallthru
          _
        // Predicated region
        $region25: #{encoder_forward.1} parent=11 // pred_check
          %p220 = pneg %p123
        $region26: #{encoder_forward.1} parent=11 // pred_check_branch
          %222 = sbr.rel (%p220) target = $region28
        $region27: #{encoder_forward.1} parent=11 // pred_region
          _
        $region28: #{encoder_forward.1} parent=11 // pred_fallthru
          _
        // Predicated region
        $region29: #{encoder_forward.1} parent=11 // pred_check
          %p223 = pneg %p144
        $region30: #{encoder_forward.1} parent=11 // pred_check_branch
          %225 = sbr.rel (%p223) target = $region32
        $region31: #{encoder_forward.1} parent=11 // pred_region
          _
        $region32: #{encoder_forward.1} parent=11 // pred_fallthru
          _
      $region12: #{encoder_forward.1} parent=5 // pred_fallthru
        _
      %p226 = scmp.lt.s32.totalorder %s13, 2
      // Predicated region
      $region33: #{encoder_forward.1} parent=5 // pred_check
        %p227 = pneg %p226
      $region34: #{encoder_forward.1} parent=5 // pred_check_branch
        %229 = sbr.rel (%p227) target = $region36
      $region35: #{encoder_forward.1} parent=5 // pred_region
        // Predicated region
        $region37: #{encoder_forward.1} parent=35 // pred_check
          %p230 = pneg %p33
        $region38: #{encoder_forward.1} parent=35 // pred_check_branch
          %232 = sbr.rel (%p230) target = $region40
        $region39: #{encoder_forward.1} parent=35 // pred_region
          %s233 = sand.u32 %s23, 1
          %s234 = sand.u32 %s23, 1
          %s235 = smul.addr %s234, 64
          %s236 = scalar_lea.vmem [#allocation2], %s235
          %s237 = smul.addr %s13, 8
          %s238 = scalar_lea.vmem %s0, %s237
          // Predicated region
          $region41: #{encoder_forward.1} parent=39 // pred_check
            _
          $region42: #{encoder_forward.1} parent=39 // pred_check_branch
            %240 = sbr.rel (0) target = $region44
          $region43: #{encoder_forward.1} parent=39 // pred_region
            // Predicated region
            $region45: #{encoder_forward.1} parent=43 // pred_check
              _
            $region46: #{encoder_forward.1} parent=43 // pred_check_branch
              %242 = sbr.rel (0) target = $region48
            $region47: #{encoder_forward.1} parent=43 // pred_region
              // Predicated region
              $region60: #{encoder_forward.1} parent=47 // pred_check
                _
              $region61: #{encoder_forward.1} parent=47 // pred_check_branch
                %272 = sbr.rel (0) target = $region63
              $region62: #{encoder_forward.1} parent=47 // pred_region
                loop: start=0, step=1, limit=1
                $region64: #{encoder_forward.1} parent=62 // loop_pre_header
                  _
                $region65: #{encoder_forward.1} parent=62 // loop_header
                  %s274 = sphi 0, %s278
                  %p275 = scmp.ge.s32.totalorder %s274, 1
                  %s279 = sphi %s238, %s238
                  %s280 = sphi %s236, %s236
                $region66: #{encoder_forward.1} parent=62 // loop_header_branch
                  %277 = sbr.rel (%p275) target = $region70
                $region67: #{encoder_forward.1} parent=62 // loop_body
                  %v281 = vld [vmem:[%s279] sm:$0xff]
                  %282 = vst [vmem:[%s280] sm:$0xff] %v281
                  %v283 = vld [vmem:[%s279 + $0x10] sm:$0xff]
                  %284 = vst [vmem:[%s280 + $0x8] sm:$0xff] %v283
                  %v285 = vld [vmem:[%s279 + $0x20] sm:$0xff]
                  %286 = vst [vmem:[%s280 + $0x10] sm:$0xff] %v285
                  %v287 = vld [vmem:[%s279 + $0x30] sm:$0xff]
                  %288 = vst [vmem:[%s280 + $0x18] sm:$0xff] %v287
                  %v289 = vld [vmem:[%s279 + $0x40] sm:$0xff]
                  %290 = vst [vmem:[%s280 + $0x20] sm:$0xff] %v289
                  %v291 = vld [vmem:[%s279 + $0x50] sm:$0xff]
                  %292 = vst [vmem:[%s280 + $0x28] sm:$0xff] %v291
                  %v293 = vld [vmem:[%s279 + $0x60] sm:$0xff]
                  %294 = vst [vmem:[%s280 + $0x30] sm:$0xff] %v293
                  %v295 = vld [vmem:[%s279 + $0x70] sm:$0xff]
                  %296 = vst [vmem:[%s280 + $0x38] sm:$0xff] %v295
                $region68: #{encoder_forward.1} parent=62 // loop_footer
                  %s278 = sadd.s32 1, %s274
                $region69: #{encoder_forward.1} parent=62 // loop_footer_branch
                  %273 = sbr.rel target = $region65
                $region70: #{encoder_forward.1} parent=62 // loop_exit
                  _
              $region63: #{encoder_forward.1} parent=47 // pred_fallthru
                _
              // Predicated region
              $region71: #{encoder_forward.1} parent=47 // pred_check
                _
              $region72: #{encoder_forward.1} parent=47 // pred_check_branch
                %298 = sbr.rel target = $region74
              $region73: #{encoder_forward.1} parent=47 // pred_region
                _
              $region74: #{encoder_forward.1} parent=47 // pred_fallthru
                _
            $region48: #{encoder_forward.1} parent=43 // pred_fallthru
              _
            // Predicated region
            $region49: #{encoder_forward.1} parent=43 // pred_check
              _
            $region50: #{encoder_forward.1} parent=43 // pred_check_branch
              %244 = sbr.rel target = $region52
            $region51: #{encoder_forward.1} parent=43 // pred_region
              %s246 = ssub.s32 256, 1
              loop: start=0, step=1, limit=1
              $region53: #{encoder_forward.1} parent=51 // loop_pre_header
                _
              $region54: #{encoder_forward.1} parent=51 // loop_header
                %s248 = sphi 0, %s252
                %p249 = scmp.ge.s32.totalorder %s248, 1
                %s253 = sphi %s238, %s238
                %s254 = sphi %s236, %s236
              $region55: #{encoder_forward.1} parent=51 // loop_header_branch
                %251 = sbr.rel (%p249) target = $region59
              $region56: #{encoder_forward.1} parent=51 // loop_body
                %v255 = vld [vmem:[%s253] sm:%s246]
                %256 = vst [vmem:[%s254] sm:%s246] %v255
                %v257 = vld [vmem:[%s253 + $0x10] sm:%s246]
                %258 = vst [vmem:[%s254 + $0x8] sm:%s246] %v257
                %v259 = vld [vmem:[%s253 + $0x20] sm:%s246]
                %260 = vst [vmem:[%s254 + $0x10] sm:%s246] %v259
                %v261 = vld [vmem:[%s253 + $0x30] sm:%s246]
                %262 = vst [vmem:[%s254 + $0x18] sm:%s246] %v261
                %v263 = vld [vmem:[%s253 + $0x40] sm:%s246]
                %264 = vst [vmem:[%s254 + $0x20] sm:%s246] %v263
                %v265 = vld [vmem:[%s253 + $0x50] sm:%s246]
                %266 = vst [vmem:[%s254 + $0x28] sm:%s246] %v265
                %v267 = vld [vmem:[%s253 + $0x60] sm:%s246]
                %268 = vst [vmem:[%s254 + $0x30] sm:%s246] %v267
                %v269 = vld [vmem:[%s253 + $0x70] sm:%s246]
                %270 = vst [vmem:[%s254 + $0x38] sm:%s246] %v269
              $region57: #{encoder_forward.1} parent=51 // loop_footer
                %s252 = sadd.s32 1, %s248
              $region58: #{encoder_forward.1} parent=51 // loop_footer_branch
                %247 = sbr.rel target = $region54
              $region59: #{encoder_forward.1} parent=51 // loop_exit
                _
            $region52: #{encoder_forward.1} parent=43 // pred_fallthru
              _
          $region44: #{encoder_forward.1} parent=39 // pred_fallthru
            _
          %299 = vnop
        $region40: #{encoder_forward.1} parent=35 // pred_fallthru
          _
        // Predicated region
        $region75: #{encoder_forward.1} parent=35 // pred_check
          %p300 = pneg %p164
        $region76: #{encoder_forward.1} parent=35 // pred_check_branch
          %302 = sbr.rel (%p300) target = $region78
        $region77: #{encoder_forward.1} parent=35 // pred_region
          %p303 = scmp.lt.s32.totalorder %s13, 1
          %s304 = scalar_select %p303, %s13, 1
          %s305 = smul.addr %s304, 8
          %s306 = scalar_lea.vmem %s6, %s305
        $region78: #{encoder_forward.1} parent=35 // pred_fallthru
          _
      $region36: #{encoder_forward.1} parent=5 // pred_fallthru
        _
      %p307 = scmp.le.s32.totalorder 1, %s13
      %p308 = scmp.lt.s32.totalorder %s13, 3
      %p309 = pnand %p307, %p308
      %p310 = pneg %p309
      // Predicated region
      $region79: #{encoder_forward.1} parent=5 // pred_check
        _
      $region80: #{encoder_forward.1} parent=5 // pred_check_branch
        %312 = sbr.rel (%p309) target = $region82
      $region81: #{encoder_forward.1} parent=5 // pred_region
        %s313 = ssub.s32 %s13, 1
        %s314 = sand.u32 %s26, 1
        %s315 = sand.u32 %s26, 1
        %s316 = smul.addr %s315, 64
        %s317 = scalar_lea.vmem [#allocation2], %s316
        // Predicated region
        $region83: #{encoder_forward.1} parent=81 // pred_check
          %p318 = pneg %p39
        $region84: #{encoder_forward.1} parent=81 // pred_check_branch
          %320 = sbr.rel (%p318) target = $region86
        $region85: #{encoder_forward.1} parent=81 // pred_region
          _
        $region86: #{encoder_forward.1} parent=81 // pred_fallthru
          _
        %s321 = sand.u32 %s26, 1
        %s322 = sand.u32 %s26, 1
        %s323 = smul.addr %s322, 64
        %s324 = scalar_lea.vmem [#allocation2], %s323
        %p325 = pneg %p39
        %p326 = pneg %p36
        %p327 = pneg %p60
        %p328 = pneg %p57
        %p329 = pneg %p81
        %p330 = pneg %p78
        %p331 = pneg %p102
        %p332 = pneg %p99
        %p333 = pneg %p123
        %p334 = pneg %p120
        %p335 = pneg %p144
        %p336 = pneg %p141
        %p337 = scmp.lt.s32.totalorder %s18, 1
        %s338 = scalar_select %p337, %s18, 1
        %s339 = smul.addr %s338, 8
        %s340 = scalar_lea.vmem %s6, %s339
        %p341 = pneg %p170
        %p342 = pneg %p167
        %p343 = pneg %p196
        %p344 = pneg %p193
        %p345 = scmp.lt.s32.totalorder %s18, 1
        %s346 = scalar_select %p345, %s18, 1
        %s347 = smul.addr %s346, 8
        %s348 = scalar_lea.vmem %s7, %s347
        %p349 = scmp.lt.s32.totalorder %s18, 1
        %s350 = scalar_select %p349, %s18, 1
        %s351 = smul.addr %s350, 8
        %s352 = scalar_lea.vmem %s6, %s351
        %p353 = scmp.lt.s32.totalorder %s18, 1
        %s354 = scalar_select %p353, %s18, 1
        %s355 = smul.addr %s354, 8
        %s356 = scalar_lea.vmem %s7, %s355
        %v357 = vld [vmem:[%s317] sm:$0xff]
        %v358 = vld [vmem:[%s317 + $0x8] sm:$0xff]
        %v359 = vld [vmem:[%s317 + $0x10] sm:$0xff]
        %v360 = vld [vmem:[%s317 + $0x18] sm:$0xff]
        %v361 = vld [vmem:[%s317 + $0x20] sm:$0xff]
        %v362 = vld [vmem:[%s317 + $0x28] sm:$0xff]
        %v363 = vld [vmem:[%s317 + $0x30] sm:$0xff]
        %v364 = vld [vmem:[%s317 + $0x38] sm:$0xff]
        %v365 = vld [vmem:[%s1] sm:$0xff]
        %v366 = vld [vmem:[%s1 + $0x8] sm:$0xff]
        %v367 = vld [vmem:[%s1 + $0x10] sm:$0xff]
        %v368 = vld [vmem:[%s1 + $0x18] sm:$0xff]
        %v369 = vld [vmem:[%s1 + $0x20] sm:$0x3]
        %v370 = vld [vmem:[%s1 + $0x28] sm:$0x3]
        %v371 = vld [vmem:[%s1 + $0x30] sm:$0x3]
        %v372 = vld [vmem:[%s1 + $0x38] sm:$0x3]
        %v373 = vld [vmem:[%s2] sm:$0xf]
        %v375 = vperm.slane %v373, 0
        %v376 = vperm.slane %v373, 1
        %v377 = vperm.slane %v373, 2
        %v378 = vperm.slane %v373, 3
        %vm383 = vcmask 80896
        %v385 = vsel %vm383, %v357, 0
        %v388 = vsel %vm383, %v358, 0
        %v391 = vsel %vm383, %v359, 0
        %v394 = vsel %vm383, %v360, 0
        %v397 = vsel %vm383, %v361, 0
        %v400 = vsel %vm383, %v362, 0
        %v403 = vsel %vm383, %v363, 0
        %v406 = vsel %vm383, %v364, 0
        %vm408 = vcmask 1041408
        %v410 = vsel %vm408, %v369, 0
        %v413 = vsel %vm408, %v370, 0
        %v416 = vsel %vm408, %v371, 0
        %v419 = vsel %vm408, %v372, 0
        %421 = vmatpush.msra.mxu0 0.0
        %422 = vmatpush.msra.mxu0 0.0
        %423 = vmatpush.msra.mxu0 0.0
        %424 = vmatpush.msra.mxu0 0.0
        %425 = vmatpush.msra.mxu0 0.0
        %426 = vmatpush.msra.mxu0 0.0
        %427 = vmatpush.msra.mxu0 0.0
        %428 = vmatpush.msra.mxu0 0.0
        %429 = vmatpush.msra.mxu0 0.0
        %430 = vmatpush.msra.mxu0 0.0
        %431 = vmatpush.msra.mxu0 0.0
        %432 = vmatpush.msra.mxu0 0.0
        %433 = vmatpush.msra.mxu0 0.0
        %434 = vmatpush.msra.mxu0 0.0
        %435 = vmatpush.msra.mxu0 %v410
        %436 = vmatpush.msra.mxu0 %v365
        %437 = vmatmul.f32.gmra.mxu0 %v385
        %v438 = vpop.f32.mrf.mxu0
        %v439 = vadd.f32 %v375, %v438
        %440 = vmatmul.f32.gmra.mxu0 %v388
        %v441 = vpop.f32.mrf.mxu0
        %v442 = vadd.f32 %v375, %v441
        %443 = vmatmul.f32.gmra.mxu0 %v391
        %v444 = vpop.f32.mrf.mxu0
        %v445 = vadd.f32 %v375, %v444
        %446 = vmatmul.f32.gmra.mxu0 %v394
        %v447 = vpop.f32.mrf.mxu0
        %v448 = vadd.f32 %v375, %v447
        %449 = vmatmul.f32.gmra.mxu0 %v397
        %v450 = vpop.f32.mrf.mxu0
        %v451 = vadd.f32 %v375, %v450
        %452 = vmatmul.f32.gmra.mxu0 %v400
        %v453 = vpop.f32.mrf.mxu0
        %v454 = vadd.f32 %v375, %v453
        %455 = vmatmul.f32.gmra.mxu0 %v403
        %v456 = vpop.f32.mrf.mxu0
        %v457 = vadd.f32 %v375, %v456
        %458 = vmatmul.f32.gmra.mxu0 %v406
        %v459 = vpop.f32.mrf.mxu0
        %v460 = vadd.f32 %v375, %v459
        %461 = vdwg.mxu0
        %462 = vmatpush.msra.mxu0 0.0
        %463 = vmatpush.msra.mxu0 0.0
        %464 = vmatpush.msra.mxu0 0.0
        %465 = vmatpush.msra.mxu0 0.0
        %466 = vmatpush.msra.mxu0 0.0
        %467 = vmatpush.msra.mxu0 0.0
        %468 = vmatpush.msra.mxu0 0.0
        %469 = vmatpush.msra.mxu0 0.0
        %470 = vmatpush.msra.mxu0 0.0
        %471 = vmatpush.msra.mxu0 0.0
        %472 = vmatpush.msra.mxu0 0.0
        %473 = vmatpush.msra.mxu0 0.0
        %474 = vmatpush.msra.mxu0 0.0
        %475 = vmatpush.msra.mxu0 0.0
        %476 = vmatpush.msra.mxu0 %v413
        %477 = vmatpush.msra.mxu0 %v366
        %478 = vmatmul.f32.gmra.mxu0 %v385
        %v479 = vpop.f32.mrf.mxu0
        %v480 = vadd.f32 %v376, %v479
        %481 = vmatmul.f32.gmra.mxu0 %v388
        %v482 = vpop.f32.mrf.mxu0
        %v483 = vadd.f32 %v376, %v482
        %484 = vmatmul.f32.gmra.mxu0 %v391
        %v485 = vpop.f32.mrf.mxu0
        %v486 = vadd.f32 %v376, %v485
        %487 = vmatmul.f32.gmra.mxu0 %v394
        %v488 = vpop.f32.mrf.mxu0
        %v489 = vadd.f32 %v376, %v488
        %490 = vmatmul.f32.gmra.mxu0 %v397
        %v491 = vpop.f32.mrf.mxu0
        %v492 = vadd.f32 %v376, %v491
        %493 = vmatmul.f32.gmra.mxu0 %v400
        %v494 = vpop.f32.mrf.mxu0
        %v495 = vadd.f32 %v376, %v494
        %496 = vmatmul.f32.gmra.mxu0 %v403
        %v497 = vpop.f32.mrf.mxu0
        %v498 = vadd.f32 %v376, %v497
        %499 = vmatmul.f32.gmra.mxu0 %v406
        %v500 = vpop.f32.mrf.mxu0
        %v501 = vadd.f32 %v376, %v500
        %502 = vdwg.mxu0
        %503 = vmatpush.msra.mxu0 0.0
        %504 = vmatpush.msra.mxu0 0.0
        %505 = vmatpush.msra.mxu0 0.0
        %506 = vmatpush.msra.mxu0 0.0
        %507 = vmatpush.msra.mxu0 0.0
        %508 = vmatpush.msra.mxu0 0.0
        %509 = vmatpush.msra.mxu0 0.0
        %510 = vmatpush.msra.mxu0 0.0
        %511 = vmatpush.msra.mxu0 0.0
        %512 = vmatpush.msra.mxu0 0.0
        %513 = vmatpush.msra.mxu0 0.0
        %514 = vmatpush.msra.mxu0 0.0
        %515 = vmatpush.msra.mxu0 0.0
        %516 = vmatpush.msra.mxu0 0.0
        %517 = vmatpush.msra.mxu0 %v416
        %518 = vmatpush.msra.mxu0 %v367
        %519 = vmatmul.f32.gmra.mxu0 %v385
        %v520 = vpop.f32.mrf.mxu0
        %v521 = vadd.f32 %v377, %v520
        %522 = vmatmul.f32.gmra.mxu0 %v388
        %v523 = vpop.f32.mrf.mxu0
        %v524 = vadd.f32 %v377, %v523
        %525 = vmatmul.f32.gmra.mxu0 %v391
        %v526 = vpop.f32.mrf.mxu0
        %v527 = vadd.f32 %v377, %v526
        %528 = vmatmul.f32.gmra.mxu0 %v394
        %v529 = vpop.f32.mrf.mxu0
        %v530 = vadd.f32 %v377, %v529
        %531 = vmatmul.f32.gmra.mxu0 %v397
        %v532 = vpop.f32.mrf.mxu0
        %v533 = vadd.f32 %v377, %v532
        %534 = vmatmul.f32.gmra.mxu0 %v400
        %v535 = vpop.f32.mrf.mxu0
        %v536 = vadd.f32 %v377, %v535
        %537 = vmatmul.f32.gmra.mxu0 %v403
        %v538 = vpop.f32.mrf.mxu0
        %v539 = vadd.f32 %v377, %v538
        %540 = vmatmul.f32.gmra.mxu0 %v406
        %v541 = vpop.f32.mrf.mxu0
        %v542 = vadd.f32 %v377, %v541
        %543 = vdwg.mxu0
        %544 = vmatpush.msra.mxu0 0.0
        %545 = vmatpush.msra.mxu0 0.0
        %546 = vmatpush.msra.mxu0 0.0
        %547 = vmatpush.msra.mxu0 0.0
        %548 = vmatpush.msra.mxu0 0.0
        %549 = vmatpush.msra.mxu0 0.0
        %550 = vmatpush.msra.mxu0 0.0
        %551 = vmatpush.msra.mxu0 0.0
        %552 = vmatpush.msra.mxu0 0.0
        %553 = vmatpush.msra.mxu0 0.0
        %554 = vmatpush.msra.mxu0 0.0
        %555 = vmatpush.msra.mxu0 0.0
        %556 = vmatpush.msra.mxu0 0.0
        %557 = vmatpush.msra.mxu0 0.0
        %558 = vmatpush.msra.mxu0 %v419
        %559 = vmatpush.msra.mxu0 %v368
        %560 = vmatmul.f32.gmra.mxu0 %v385
        %v561 = vpop.f32.mrf.mxu0
        %v562 = vadd.f32 %v378, %v561
        %563 = vmatmul.f32.gmra.mxu0 %v388
        %v564 = vpop.f32.mrf.mxu0
        %v565 = vadd.f32 %v378, %v564
        %566 = vmatmul.f32.gmra.mxu0 %v391
        %v567 = vpop.f32.mrf.mxu0
        %v568 = vadd.f32 %v378, %v567
        %569 = vmatmul.f32.gmra.mxu0 %v394
        %v570 = vpop.f32.mrf.mxu0
        %v571 = vadd.f32 %v378, %v570
        %572 = vmatmul.f32.gmra.mxu0 %v397
        %v573 = vpop.f32.mrf.mxu0
        %v574 = vadd.f32 %v378, %v573
        %575 = vmatmul.f32.gmra.mxu0 %v400
        %v576 = vpop.f32.mrf.mxu0
        %v577 = vadd.f32 %v378, %v576
        %578 = vmatmul.f32.gmra.mxu0 %v403
        %v579 = vpop.f32.mrf.mxu0
        %v580 = vadd.f32 %v378, %v579
        %581 = vmatmul.f32.gmra.mxu0 %v406
        %v582 = vpop.f32.mrf.mxu0
        %v583 = vadd.f32 %v378, %v582
        %584 = vdwg.mxu0
        %v585 = vld [vmem:[%s3] sm:$0xff]
        %v586 = vld [vmem:[%s3 + $0x8] sm:$0xff]
        %v587 = vld [vmem:[%s3 + $0x10] sm:$0xff]
        %v588 = vld [vmem:[%s3 + $0x18] sm:$0xff]
        %v589 = vld [vmem:[%s3 + $0x20] sm:$0xff]
        %v590 = vld [vmem:[%s3 + $0x28] sm:$0xff]
        %v591 = vld [vmem:[%s3 + $0x30] sm:$0xff]
        %v592 = vld [vmem:[%s3 + $0x38] sm:$0xff]
        %v593 = vld [vmem:[%s3 + $0x40] sm:$0xff]
        %v594 = vld [vmem:[%s3 + $0x48] sm:$0xff]
        %v595 = vld [vmem:[%s3 + $0x50] sm:$0xff]
        %v596 = vld [vmem:[%s3 + $0x58] sm:$0xff]
        %v597 = vld [vmem:[%s3 + $0x60] sm:$0xff]
        %v598 = vld [vmem:[%s3 + $0x68] sm:$0xff]
        %v599 = vld [vmem:[%s3 + $0x70] sm:$0xff]
        %v600 = vld [vmem:[%s3 + $0x78] sm:$0xff]
        %v601 = vld [vmem:[%s3 + $0x80] sm:$0xff]
        %v602 = vld [vmem:[%s3 + $0x88] sm:$0xff]
        %v603 = vld [vmem:[%s3 + $0x90] sm:$0xff]
        %v604 = vld [vmem:[%s3 + $0x98] sm:$0xff]
        %v605 = vld [vmem:[%s3 + $0xa0] sm:$0xff]
        %v606 = vld [vmem:[%s3 + $0xa8] sm:$0xff]
        %v607 = vld [vmem:[%s3 + $0xb0] sm:$0xff]
        %v608 = vld [vmem:[%s3 + $0xb8] sm:$0xff]
        %v609 = vld [vmem:[%s3 + $0xc0] sm:$0xff]
        %v610 = vld [vmem:[%s3 + $0xc8] sm:$0xff]
        %v611 = vld [vmem:[%s3 + $0xd0] sm:$0xff]
        %v612 = vld [vmem:[%s3 + $0xd8] sm:$0xff]
        %v613 = vld [vmem:[%s3 + $0xe0] sm:$0xff]
        %v614 = vld [vmem:[%s3 + $0xe8] sm:$0xff]
        %v615 = vld [vmem:[%s3 + $0xf0] sm:$0xff]
        %v616 = vld [vmem:[%s3 + $0xf8] sm:$0xff]
        %v617 = vld [vmem:[%s3 + $0x100] sm:$0xff]
        %v618 = vld [vmem:[%s3 + $0x108] sm:$0xff]
        %v619 = vld [vmem:[%s3 + $0x110] sm:$0xff]
        %v620 = vld [vmem:[%s3 + $0x118] sm:$0xff]
        %v621 = vld [vmem:[%s3 + $0x120] sm:$0xff]
        %v622 = vld [vmem:[%s3 + $0x128] sm:$0xff]
        %v623 = vld [vmem:[%s3 + $0x130] sm:$0xff]
        %v624 = vld [vmem:[%s3 + $0x138] sm:$0xff]
        %v625 = vld [vmem:[%s3 + $0x140] sm:$0xff]
        %v626 = vld [vmem:[%s3 + $0x148] sm:$0xff]
        %v627 = vld [vmem:[%s3 + $0x150] sm:$0xff]
        %v628 = vld [vmem:[%s3 + $0x158] sm:$0xff]
        %v629 = vld [vmem:[%s3 + $0x160] sm:$0xff]
        %v630 = vld [vmem:[%s3 + $0x168] sm:$0xff]
        %v631 = vld [vmem:[%s3 + $0x170] sm:$0xff]
        %v632 = vld [vmem:[%s3 + $0x178] sm:$0xff]
        %v633 = vld [vmem:[%s3 + $0x180] sm:$0xff]
        %v634 = vld [vmem:[%s3 + $0x188] sm:$0xff]
        %v635 = vld [vmem:[%s3 + $0x190] sm:$0xff]
        %v636 = vld [vmem:[%s3 + $0x198] sm:$0xff]
        %v637 = vld [vmem:[%s3 + $0x1a0] sm:$0xff]
        %v638 = vld [vmem:[%s3 + $0x1a8] sm:$0xff]
        %v639 = vld [vmem:[%s3 + $0x1b0] sm:$0xff]
        %v640 = vld [vmem:[%s3 + $0x1b8] sm:$0xff]
        %v641 = vld [vmem:[%s3 + $0x1c0] sm:$0xff]
        %v642 = vld [vmem:[%s3 + $0x1c8] sm:$0xff]
        %v643 = vld [vmem:[%s3 + $0x1d0] sm:$0xff]
        %v644 = vld [vmem:[%s3 + $0x1d8] sm:$0xff]
        %v645 = vld [vmem:[%s3 + $0x1e0] sm:$0xff]
        %v646 = vld [vmem:[%s3 + $0x1e8] sm:$0xff]
        %v647 = vld [vmem:[%s3 + $0x1f0] sm:$0xff]
        %v648 = vld [vmem:[%s3 + $0x1f8] sm:$0xff]
        %649 = vmatpush.msra.mxu0 %v645
        %650 = vmatpush.msra.mxu0 %v641
        %651 = vmatpush.msra.mxu0 %v637
        %652 = vmatpush.msra.mxu0 %v633
        %653 = vmatpush.msra.mxu0 %v629
        %654 = vmatpush.msra.mxu0 %v625
        %655 = vmatpush.msra.mxu0 %v621
        %656 = vmatpush.msra.mxu0 %v617
        %657 = vmatpush.msra.mxu0 %v613
        %658 = vmatpush.msra.mxu0 %v609
        %659 = vmatpush.msra.mxu0 %v605
        %660 = vmatpush.msra.mxu0 %v601
        %661 = vmatpush.msra.mxu0 %v597
        %662 = vmatpush.msra.mxu0 %v593
        %663 = vmatpush.msra.mxu0 %v589
        %664 = vmatpush.msra.mxu0 %v585
        %665 = vmatmul.f32.gmra.mxu0 0.0
        %v666 = vpop.f32.mrf.mxu0
        %v667 = vadd.f32 0.0, %v666
        %668 = vdwg.mxu0
        %669 = vmatpush.msra.mxu0 %v646
        %670 = vmatpush.msra.mxu0 %v642
        %671 = vmatpush.msra.mxu0 %v638
        %672 = vmatpush.msra.mxu0 %v634
        %673 = vmatpush.msra.mxu0 %v630
        %674 = vmatpush.msra.mxu0 %v626
        %675 = vmatpush.msra.mxu0 %v622
        %676 = vmatpush.msra.mxu0 %v618
        %677 = vmatpush.msra.mxu0 %v614
        %678 = vmatpush.msra.mxu0 %v610
        %679 = vmatpush.msra.mxu0 %v606
        %680 = vmatpush.msra.mxu0 %v602
        %681 = vmatpush.msra.mxu0 %v598
        %682 = vmatpush.msra.mxu0 %v594
        %683 = vmatpush.msra.mxu0 %v590
        %684 = vmatpush.msra.mxu0 %v586
        %685 = vmatmul.f32.gmra.mxu0 0.0
        %v686 = vpop.f32.mrf.mxu0
        %v687 = vadd.f32 0.0, %v686
        %688 = vdwg.mxu0
        %689 = vmatpush.msra.mxu0 %v647
        %690 = vmatpush.msra.mxu0 %v643
        %691 = vmatpush.msra.mxu0 %v639
        %692 = vmatpush.msra.mxu0 %v635
        %693 = vmatpush.msra.mxu0 %v631
        %694 = vmatpush.msra.mxu0 %v627
        %695 = vmatpush.msra.mxu0 %v623
        %696 = vmatpush.msra.mxu0 %v619
        %697 = vmatpush.msra.mxu0 %v615
        %698 = vmatpush.msra.mxu0 %v611
        %699 = vmatpush.msra.mxu0 %v607
        %700 = vmatpush.msra.mxu0 %v603
        %701 = vmatpush.msra.mxu0 %v599
        %702 = vmatpush.msra.mxu0 %v595
        %703 = vmatpush.msra.mxu0 %v591
        %704 = vmatpush.msra.mxu0 %v587
        %705 = vmatmul.f32.gmra.mxu0 0.0
        %v706 = vpop.f32.mrf.mxu0
        %v707 = vadd.f32 0.0, %v706
        %708 = vdwg.mxu0
        %709 = vmatpush.msra.mxu0 %v648
        %710 = vmatpush.msra.mxu0 %v644
        %711 = vmatpush.msra.mxu0 %v640
        %712 = vmatpush.msra.mxu0 %v636
        %713 = vmatpush.msra.mxu0 %v632
        %714 = vmatpush.msra.mxu0 %v628
        %715 = vmatpush.msra.mxu0 %v624
        %716 = vmatpush.msra.mxu0 %v620
        %717 = vmatpush.msra.mxu0 %v616
        %718 = vmatpush.msra.mxu0 %v612
        %719 = vmatpush.msra.mxu0 %v608
        %720 = vmatpush.msra.mxu0 %v604
        %721 = vmatpush.msra.mxu0 %v600
        %722 = vmatpush.msra.mxu0 %v596
        %723 = vmatpush.msra.mxu0 %v592
        %724 = vmatpush.msra.mxu0 %v588
        %725 = vmatmul.f32.gmra.mxu0 0.0
        %v726 = vpop.f32.mrf.mxu0
        %v727 = vadd.f32 0.0, %v726
        %728 = vdwg.mxu0
        %v729 = vadd.f32 %v439, %v667
        %v730 = vadd.f32 %v480, %v687
        %v731 = vadd.f32 %v521, %v707
        %v732 = vadd.f32 %v562, %v727
        %v733 = vxor.u32 %v729, 2147483648
        %v734 = vxor.u32 %v730, 2147483648
        %v735 = vxor.u32 %v731, 2147483648
        %v736 = vmul.f32 %v733, 1.442695
        %v737 = vpow.pop %v736
        %v738 = vmul.f32 %v734, 1.442695
        %v739 = vpow.pop %v738
        %v740 = vmul.f32 %v735, 1.442695
        %v741 = vpow.pop %v740
        %v742 = vadd.f32 %v737, 1.0
        %v743 = vadd.f32 %v739, 1.0
        %v744 = vadd.f32 %v741, 1.0
        %v745 = vrcp.pop %v742
        %v746 = vmul.f32 %v742, %v745
        %v747 = vsub.f32 1.0, %v746
        %v748 = vmul.f32 %v745, %v747
        %v749 = vadd.f32 %v745, %v748
        %vm750 = vweird.f32 %v742
        %vm751 = vweird.f32 %v745
        %vm752 = vmor %vm750, %vm751
        %v753 = vsel %vm752, %v745, %v749
        %v754 = vand.u32 2147483647, %v742
        %vm755 = vcmp.eq.f32.partialorder %v754, 8.507059e+37
        %v756 = vand.u32 %v742, 2147483648
        %v757 = vor.u32 1.1754944e-38, %v756
        %v758 = vsel %vm755, %v757, %v753
        %v759 = vmul.f32 1.0, %v758
        %v760 = vrcp.pop %v743
        %v761 = vmul.f32 %v743, %v760
        %v762 = vsub.f32 1.0, %v761
        %v763 = vmul.f32 %v760, %v762
        %v764 = vadd.f32 %v760, %v763
        %vm765 = vweird.f32 %v743
        %vm766 = vweird.f32 %v760
        %vm767 = vmor %vm765, %vm766
        %v768 = vsel %vm767, %v760, %v764
        %v769 = vand.u32 2147483647, %v743
        %vm770 = vcmp.eq.f32.partialorder %v769, 8.507059e+37
        %v771 = vand.u32 %v743, 2147483648
        %v772 = vor.u32 1.1754944e-38, %v771
        %v773 = vsel %vm770, %v772, %v768
        %v774 = vmul.f32 1.0, %v773
        %v775 = vrcp.pop %v744
        %v776 = vmul.f32 %v744, %v775
        %v777 = vsub.f32 1.0, %v776
        %v778 = vmul.f32 %v775, %v777
        %v779 = vadd.f32 %v775, %v778
        %vm780 = vweird.f32 %v744
        %vm781 = vweird.f32 %v775
        %vm782 = vmor %vm780, %vm781
        %v783 = vsel %vm782, %v775, %v779
        %v784 = vand.u32 2147483647, %v744
        %vm785 = vcmp.eq.f32.partialorder %v784, 8.507059e+37
        %v786 = vand.u32 %v744, 2147483648
        %v787 = vor.u32 1.1754944e-38, %v786
        %v788 = vsel %vm785, %v787, %v783
        %v789 = vmul.f32 1.0, %v788
        %v790 = vtanh.pop %v732
        %v791 = vmul.f32 %v774, 0.0
        %v792 = vmul.f32 %v759, %v790
        %v793 = vadd.f32 %v791, %v792
        %v794 = vtanh.pop %v793
        %v795 = vmul.f32 %v789, %v794
        %796 = vmatpush.msra.mxu0 %v645
        %797 = vmatpush.msra.mxu0 %v641
        %798 = vmatpush.msra.mxu0 %v637
        %799 = vmatpush.msra.mxu0 %v633
        %800 = vmatpush.msra.mxu0 %v629
        %801 = vmatpush.msra.mxu0 %v625
        %802 = vmatpush.msra.mxu0 %v621
        %803 = vmatpush.msra.mxu0 %v617
        %804 = vmatpush.msra.mxu0 %v613
        %805 = vmatpush.msra.mxu0 %v609
        %806 = vmatpush.msra.mxu0 %v605
        %807 = vmatpush.msra.mxu0 %v601
        %808 = vmatpush.msra.mxu0 %v597
        %809 = vmatpush.msra.mxu0 %v593
        %810 = vmatpush.msra.mxu0 %v589
        %811 = vmatpush.msra.mxu0 %v585
        %812 = vmatmul.f32.gmra.mxu0 %v795
        %v813 = vpop.f32.mrf.mxu0
        %v814 = vadd.f32 0.0, %v813
        %815 = vdwg.mxu0
        %816 = vmatpush.msra.mxu0 %v646
        %817 = vmatpush.msra.mxu0 %v642
        %818 = vmatpush.msra.mxu0 %v638
        %819 = vmatpush.msra.mxu0 %v634
        %820 = vmatpush.msra.mxu0 %v630
        %821 = vmatpush.msra.mxu0 %v626
        %822 = vmatpush.msra.mxu0 %v622
        %823 = vmatpush.msra.mxu0 %v618
        %824 = vmatpush.msra.mxu0 %v614
        %825 = vmatpush.msra.mxu0 %v610
        %826 = vmatpush.msra.mxu0 %v606
        %827 = vmatpush.msra.mxu0 %v602
        %828 = vmatpush.msra.mxu0 %v598
        %829 = vmatpush.msra.mxu0 %v594
        %830 = vmatpush.msra.mxu0 %v590
        %831 = vmatpush.msra.mxu0 %v586
        %832 = vmatmul.f32.gmra.mxu0 %v795
        %v833 = vpop.f32.mrf.mxu0
        %v834 = vadd.f32 0.0, %v833
        %835 = vdwg.mxu0
        %836 = vmatpush.msra.mxu0 %v647
        %837 = vmatpush.msra.mxu0 %v643
        %838 = vmatpush.msra.mxu0 %v639
        %839 = vmatpush.msra.mxu0 %v635
        %840 = vmatpush.msra.mxu0 %v631
        %841 = vmatpush.msra.mxu0 %v627
        %842 = vmatpush.msra.mxu0 %v623
        %843 = vmatpush.msra.mxu0 %v619
        %844 = vmatpush.msra.mxu0 %v615
        %845 = vmatpush.msra.mxu0 %v611
        %846 = vmatpush.msra.mxu0 %v607
        %847 = vmatpush.msra.mxu0 %v603
        %848 = vmatpush.msra.mxu0 %v599
        %849 = vmatpush.msra.mxu0 %v595
        %850 = vmatpush.msra.mxu0 %v591
        %851 = vmatpush.msra.mxu0 %v587
        %852 = vmatmul.f32.gmra.mxu0 %v795
        %v853 = vpop.f32.mrf.mxu0
        %v854 = vadd.f32 0.0, %v853
        %855 = vdwg.mxu0
        %856 = vmatpush.msra.mxu0 %v648
        %857 = vmatpush.msra.mxu0 %v644
        %858 = vmatpush.msra.mxu0 %v640
        %859 = vmatpush.msra.mxu0 %v636
        %860 = vmatpush.msra.mxu0 %v632
        %861 = vmatpush.msra.mxu0 %v628
        %862 = vmatpush.msra.mxu0 %v624
        %863 = vmatpush.msra.mxu0 %v620
        %864 = vmatpush.msra.mxu0 %v616
        %865 = vmatpush.msra.mxu0 %v612
        %866 = vmatpush.msra.mxu0 %v608
        %867 = vmatpush.msra.mxu0 %v604
        %868 = vmatpush.msra.mxu0 %v600
        %869 = vmatpush.msra.mxu0 %v596
        %870 = vmatpush.msra.mxu0 %v592
        %871 = vmatpush.msra.mxu0 %v588
        %872 = vmatmul.f32.gmra.mxu0 %v795
        %v873 = vpop.f32.mrf.mxu0
        %v874 = vadd.f32 0.0, %v873
        %875 = vdwg.mxu0
        %v876 = vadd.f32 %v442, %v814
        %v877 = vadd.f32 %v483, %v834
        %v878 = vadd.f32 %v524, %v854
        %v879 = vadd.f32 %v565, %v874
        %v880 = vxor.u32 %v876, 2147483648
        %v881 = vxor.u32 %v877, 2147483648
        %v882 = vxor.u32 %v878, 2147483648
        %v883 = vmul.f32 %v880, 1.442695
        %v884 = vpow.pop %v883
        %v885 = vmul.f32 %v881, 1.442695
        %v886 = vpow.pop %v885
        %v887 = vmul.f32 %v882, 1.442695
        %v888 = vpow.pop %v887
        %v889 = vadd.f32 %v884, 1.0
        %v890 = vadd.f32 %v886, 1.0
        %v891 = vadd.f32 %v888, 1.0
        %v892 = vrcp.pop %v889
        %v893 = vmul.f32 %v889, %v892
        %v894 = vsub.f32 1.0, %v893
        %v895 = vmul.f32 %v892, %v894
        %v896 = vadd.f32 %v892, %v895
        %vm897 = vweird.f32 %v889
        %vm898 = vweird.f32 %v892
        %vm899 = vmor %vm897, %vm898
        %v900 = vsel %vm899, %v892, %v896
        %v901 = vand.u32 2147483647, %v889
        %vm902 = vcmp.eq.f32.partialorder %v901, 8.507059e+37
        %v903 = vand.u32 %v889, 2147483648
        %v904 = vor.u32 1.1754944e-38, %v903
        %v905 = vsel %vm902, %v904, %v900
        %v906 = vmul.f32 1.0, %v905
        %v907 = vrcp.pop %v890
        %v908 = vmul.f32 %v890, %v907
        %v909 = vsub.f32 1.0, %v908
        %v910 = vmul.f32 %v907, %v909
        %v911 = vadd.f32 %v907, %v910
        %vm912 = vweird.f32 %v890
        %vm913 = vweird.f32 %v907
        %vm914 = vmor %vm912, %vm913
        %v915 = vsel %vm914, %v907, %v911
        %v916 = vand.u32 2147483647, %v890
        %vm917 = vcmp.eq.f32.partialorder %v916, 8.507059e+37
        %v918 = vand.u32 %v890, 2147483648
        %v919 = vor.u32 1.1754944e-38, %v918
        %v920 = vsel %vm917, %v919, %v915
        %v921 = vmul.f32 1.0, %v920
        %v922 = vrcp.pop %v891
        %v923 = vmul.f32 %v891, %v922
        %v924 = vsub.f32 1.0, %v923
        %v925 = vmul.f32 %v922, %v924
        %v926 = vadd.f32 %v922, %v925
        %vm927 = vweird.f32 %v891
        %vm928 = vweird.f32 %v922
        %vm929 = vmor %vm927, %vm928
        %v930 = vsel %vm929, %v922, %v926
        %v931 = vand.u32 2147483647, %v891
        %vm932 = vcmp.eq.f32.partialorder %v931, 8.507059e+37
        %v933 = vand.u32 %v891, 2147483648
        %v934 = vor.u32 1.1754944e-38, %v933
        %v935 = vsel %vm932, %v934, %v930
        %v936 = vmul.f32 1.0, %v935
        %v937 = vtanh.pop %v879
        %v938 = vmul.f32 %v921, %v793
        %v939 = vmul.f32 %v906, %v937
        %v940 = vadd.f32 %v938, %v939
        %v941 = vtanh.pop %v940
        %v942 = vmul.f32 %v936, %v941
        %943 = vmatpush.msra.mxu0 %v645
        %944 = vmatpush.msra.mxu0 %v641
        %945 = vmatpush.msra.mxu0 %v637
        %946 = vmatpush.msra.mxu0 %v633
        %947 = vmatpush.msra.mxu0 %v629
        %948 = vmatpush.msra.mxu0 %v625
        %949 = vmatpush.msra.mxu0 %v621
        %950 = vmatpush.msra.mxu0 %v617
        %951 = vmatpush.msra.mxu0 %v613
        %952 = vmatpush.msra.mxu0 %v609
        %953 = vmatpush.msra.mxu0 %v605
        %954 = vmatpush.msra.mxu0 %v601
        %955 = vmatpush.msra.mxu0 %v597
        %956 = vmatpush.msra.mxu0 %v593
        %957 = vmatpush.msra.mxu0 %v589
        %958 = vmatpush.msra.mxu0 %v585
        %959 = vmatmul.f32.gmra.mxu0 %v942
        %v960 = vpop.f32.mrf.mxu0
        %v961 = vadd.f32 0.0, %v960
        %962 = vdwg.mxu0
        %963 = vmatpush.msra.mxu0 %v646
        %964 = vmatpush.msra.mxu0 %v642
        %965 = vmatpush.msra.mxu0 %v638
        %966 = vmatpush.msra.mxu0 %v634
        %967 = vmatpush.msra.mxu0 %v630
        %968 = vmatpush.msra.mxu0 %v626
        %969 = vmatpush.msra.mxu0 %v622
        %970 = vmatpush.msra.mxu0 %v618
        %971 = vmatpush.msra.mxu0 %v614
        %972 = vmatpush.msra.mxu0 %v610
        %973 = vmatpush.msra.mxu0 %v606
        %974 = vmatpush.msra.mxu0 %v602
        %975 = vmatpush.msra.mxu0 %v598
        %976 = vmatpush.msra.mxu0 %v594
        %977 = vmatpush.msra.mxu0 %v590
        %978 = vmatpush.msra.mxu0 %v586
        %979 = vmatmul.f32.gmra.mxu0 %v942
        %v980 = vpop.f32.mrf.mxu0
        %v981 = vadd.f32 0.0, %v980
        %982 = vdwg.mxu0
        %983 = vmatpush.msra.mxu0 %v647
        %984 = vmatpush.msra.mxu0 %v643
        %985 = vmatpush.msra.mxu0 %v639
        %986 = vmatpush.msra.mxu0 %v635
        %987 = vmatpush.msra.mxu0 %v631
        %988 = vmatpush.msra.mxu0 %v627
        %989 = vmatpush.msra.mxu0 %v623
        %990 = vmatpush.msra.mxu0 %v619
        %991 = vmatpush.msra.mxu0 %v615
        %992 = vmatpush.msra.mxu0 %v611
        %993 = vmatpush.msra.mxu0 %v607
        %994 = vmatpush.msra.mxu0 %v603
        %995 = vmatpush.msra.mxu0 %v599
        %996 = vmatpush.msra.mxu0 %v595
        %997 = vmatpush.msra.mxu0 %v591
        %998 = vmatpush.msra.mxu0 %v587
        %999 = vmatmul.f32.gmra.mxu0 %v942
        %v1000 = vpop.f32.mrf.mxu0
        %v1001 = vadd.f32 0.0, %v1000
        %1002 = vdwg.mxu0
        %1003 = vmatpush.msra.mxu0 %v648
        %1004 = vmatpush.msra.mxu0 %v644
        %1005 = vmatpush.msra.mxu0 %v640
        %1006 = vmatpush.msra.mxu0 %v636
        %1007 = vmatpush.msra.mxu0 %v632
        %1008 = vmatpush.msra.mxu0 %v628
        %1009 = vmatpush.msra.mxu0 %v624
        %1010 = vmatpush.msra.mxu0 %v620
        %1011 = vmatpush.msra.mxu0 %v616
        %1012 = vmatpush.msra.mxu0 %v612
        %1013 = vmatpush.msra.mxu0 %v608
        %1014 = vmatpush.msra.mxu0 %v604
        %1015 = vmatpush.msra.mxu0 %v600
        %1016 = vmatpush.msra.mxu0 %v596
        %1017 = vmatpush.msra.mxu0 %v592
        %1018 = vmatpush.msra.mxu0 %v588
        %1019 = vmatmul.f32.gmra.mxu0 %v942
        %v1020 = vpop.f32.mrf.mxu0
        %v1021 = vadd.f32 0.0, %v1020
        %1022 = vdwg.mxu0
        %v1023 = vadd.f32 %v445, %v961
        %v1024 = vadd.f32 %v486, %v981
        %v1025 = vadd.f32 %v527, %v1001
        %v1026 = vadd.f32 %v568, %v1021
        %v1027 = vxor.u32 %v1023, 2147483648
        %v1028 = vxor.u32 %v1024, 2147483648
        %v1029 = vxor.u32 %v1025, 2147483648
        %v1030 = vmul.f32 %v1027, 1.442695
        %v1031 = vpow.pop %v1030
        %v1032 = vmul.f32 %v1028, 1.442695
        %v1033 = vpow.pop %v1032
        %v1034 = vmul.f32 %v1029, 1.442695
        %v1035 = vpow.pop %v1034
        %v1036 = vadd.f32 %v1031, 1.0
        %v1037 = vadd.f32 %v1033, 1.0
        %v1038 = vadd.f32 %v1035, 1.0
        %v1039 = vrcp.pop %v1036
        %v1040 = vmul.f32 %v1036, %v1039
        %v1041 = vsub.f32 1.0, %v1040
        %v1042 = vmul.f32 %v1039, %v1041
        %v1043 = vadd.f32 %v1039, %v1042
        %vm1044 = vweird.f32 %v1036
        %vm1045 = vweird.f32 %v1039
        %vm1046 = vmor %vm1044, %vm1045
        %v1047 = vsel %vm1046, %v1039, %v1043
        %v1048 = vand.u32 2147483647, %v1036
        %vm1049 = vcmp.eq.f32.partialorder %v1048, 8.507059e+37
        %v1050 = vand.u32 %v1036, 2147483648
        %v1051 = vor.u32 1.1754944e-38, %v1050
        %v1052 = vsel %vm1049, %v1051, %v1047
        %v1053 = vmul.f32 1.0, %v1052
        %v1054 = vrcp.pop %v1037
        %v1055 = vmul.f32 %v1037, %v1054
        %v1056 = vsub.f32 1.0, %v1055
        %v1057 = vmul.f32 %v1054, %v1056
        %v1058 = vadd.f32 %v1054, %v1057
        %vm1059 = vweird.f32 %v1037
        %vm1060 = vweird.f32 %v1054
        %vm1061 = vmor %vm1059, %vm1060
        %v1062 = vsel %vm1061, %v1054, %v1058
        %v1063 = vand.u32 2147483647, %v1037
        %vm1064 = vcmp.eq.f32.partialorder %v1063, 8.507059e+37
        %v1065 = vand.u32 %v1037, 2147483648
        %v1066 = vor.u32 1.1754944e-38, %v1065
        %v1067 = vsel %vm1064, %v1066, %v1062
        %v1068 = vmul.f32 1.0, %v1067
        %v1069 = vrcp.pop %v1038
        %v1070 = vmul.f32 %v1038, %v1069
        %v1071 = vsub.f32 1.0, %v1070
        %v1072 = vmul.f32 %v1069, %v1071
        %v1073 = vadd.f32 %v1069, %v1072
        %vm1074 = vweird.f32 %v1038
        %vm1075 = vweird.f32 %v1069
        %vm1076 = vmor %vm1074, %vm1075
        %v1077 = vsel %vm1076, %v1069, %v1073
        %v1078 = vand.u32 2147483647, %v1038
        %vm1079 = vcmp.eq.f32.partialorder %v1078, 8.507059e+37
        %v1080 = vand.u32 %v1038, 2147483648
        %v1081 = vor.u32 1.1754944e-38, %v1080
        %v1082 = vsel %vm1079, %v1081, %v1077
        %v1083 = vmul.f32 1.0, %v1082
        %v1084 = vtanh.pop %v1026
        %v1085 = vmul.f32 %v1068, %v940
        %v1086 = vmul.f32 %v1053, %v1084
        %v1087 = vadd.f32 %v1085, %v1086
        %v1088 = vtanh.pop %v1087
        %v1089 = vmul.f32 %v1083, %v1088
        %1090 = vmatpush.msra.mxu0 %v645
        %1091 = vmatpush.msra.mxu0 %v641
        %1092 = vmatpush.msra.mxu0 %v637
        %1093 = vmatpush.msra.mxu0 %v633
        %1094 = vmatpush.msra.mxu0 %v629
        %1095 = vmatpush.msra.mxu0 %v625
        %1096 = vmatpush.msra.mxu0 %v621
        %1097 = vmatpush.msra.mxu0 %v617
        %1098 = vmatpush.msra.mxu0 %v613
        %1099 = vmatpush.msra.mxu0 %v609
        %1100 = vmatpush.msra.mxu0 %v605
        %1101 = vmatpush.msra.mxu0 %v601
        %1102 = vmatpush.msra.mxu0 %v597
        %1103 = vmatpush.msra.mxu0 %v593
        %1104 = vmatpush.msra.mxu0 %v589
        %1105 = vmatpush.msra.mxu0 %v585
        %1106 = vmatmul.f32.gmra.mxu0 %v1089
        %v1107 = vpop.f32.mrf.mxu0
        %v1108 = vadd.f32 0.0, %v1107
        %1109 = vdwg.mxu0
        %1110 = vmatpush.msra.mxu0 %v646
        %1111 = vmatpush.msra.mxu0 %v642
        %1112 = vmatpush.msra.mxu0 %v638
        %1113 = vmatpush.msra.mxu0 %v634
        %1114 = vmatpush.msra.mxu0 %v630
        %1115 = vmatpush.msra.mxu0 %v626
        %1116 = vmatpush.msra.mxu0 %v622
        %1117 = vmatpush.msra.mxu0 %v618
        %1118 = vmatpush.msra.mxu0 %v614
        %1119 = vmatpush.msra.mxu0 %v610
        %1120 = vmatpush.msra.mxu0 %v606
        %1121 = vmatpush.msra.mxu0 %v602
        %1122 = vmatpush.msra.mxu0 %v598
        %1123 = vmatpush.msra.mxu0 %v594
        %1124 = vmatpush.msra.mxu0 %v590
        %1125 = vmatpush.msra.mxu0 %v586
        %1126 = vmatmul.f32.gmra.mxu0 %v1089
        %v1127 = vpop.f32.mrf.mxu0
        %v1128 = vadd.f32 0.0, %v1127
        %1129 = vdwg.mxu0
        %1130 = vmatpush.msra.mxu0 %v647
        %1131 = vmatpush.msra.mxu0 %v643
        %1132 = vmatpush.msra.mxu0 %v639
        %1133 = vmatpush.msra.mxu0 %v635
        %1134 = vmatpush.msra.mxu0 %v631
        %1135 = vmatpush.msra.mxu0 %v627
        %1136 = vmatpush.msra.mxu0 %v623
        %1137 = vmatpush.msra.mxu0 %v619
        %1138 = vmatpush.msra.mxu0 %v615
        %1139 = vmatpush.msra.mxu0 %v611
        %1140 = vmatpush.msra.mxu0 %v607
        %1141 = vmatpush.msra.mxu0 %v603
        %1142 = vmatpush.msra.mxu0 %v599
        %1143 = vmatpush.msra.mxu0 %v595
        %1144 = vmatpush.msra.mxu0 %v591
        %1145 = vmatpush.msra.mxu0 %v587
        %1146 = vmatmul.f32.gmra.mxu0 %v1089
        %v1147 = vpop.f32.mrf.mxu0
        %v1148 = vadd.f32 0.0, %v1147
        %1149 = vdwg.mxu0
        %1150 = vmatpush.msra.mxu0 %v648
        %1151 = vmatpush.msra.mxu0 %v644
        %1152 = vmatpush.msra.mxu0 %v640
        %1153 = vmatpush.msra.mxu0 %v636
        %1154 = vmatpush.msra.mxu0 %v632
        %1155 = vmatpush.msra.mxu0 %v628
        %1156 = vmatpush.msra.mxu0 %v624
        %1157 = vmatpush.msra.mxu0 %v620
        %1158 = vmatpush.msra.mxu0 %v616
        %1159 = vmatpush.msra.mxu0 %v612
        %1160 = vmatpush.msra.mxu0 %v608
        %1161 = vmatpush.msra.mxu0 %v604
        %1162 = vmatpush.msra.mxu0 %v600
        %1163 = vmatpush.msra.mxu0 %v596
        %1164 = vmatpush.msra.mxu0 %v592
        %1165 = vmatpush.msra.mxu0 %v588
        %1166 = vmatmul.f32.gmra.mxu0 %v1089
        %v1167 = vpop.f32.mrf.mxu0
        %v1168 = vadd.f32 0.0, %v1167
        %1169 = vdwg.mxu0
        %v1170 = vadd.f32 %v448, %v1108
        %v1171 = vadd.f32 %v489, %v1128
        %v1172 = vadd.f32 %v530, %v1148
        %v1173 = vadd.f32 %v571, %v1168
        %v1174 = vxor.u32 %v1170, 2147483648
        %v1175 = vxor.u32 %v1171, 2147483648
        %v1176 = vxor.u32 %v1172, 2147483648
        %v1177 = vmul.f32 %v1174, 1.442695
        %v1178 = vpow.pop %v1177
        %v1179 = vmul.f32 %v1175, 1.442695
        %v1180 = vpow.pop %v1179
        %v1181 = vmul.f32 %v1176, 1.442695
        %v1182 = vpow.pop %v1181
        %v1183 = vadd.f32 %v1178, 1.0
        %v1184 = vadd.f32 %v1180, 1.0
        %v1185 = vadd.f32 %v1182, 1.0
        %v1186 = vrcp.pop %v1183
        %v1187 = vmul.f32 %v1183, %v1186
        %v1188 = vsub.f32 1.0, %v1187
        %v1189 = vmul.f32 %v1186, %v1188
        %v1190 = vadd.f32 %v1186, %v1189
        %vm1191 = vweird.f32 %v1183
        %vm1192 = vweird.f32 %v1186
        %vm1193 = vmor %vm1191, %vm1192
        %v1194 = vsel %vm1193, %v1186, %v1190
        %v1195 = vand.u32 2147483647, %v1183
        %vm1196 = vcmp.eq.f32.partialorder %v1195, 8.507059e+37
        %v1197 = vand.u32 %v1183, 2147483648
        %v1198 = vor.u32 1.1754944e-38, %v1197
        %v1199 = vsel %vm1196, %v1198, %v1194
        %v1200 = vmul.f32 1.0, %v1199
        %v1201 = vrcp.pop %v1184
        %v1202 = vmul.f32 %v1184, %v1201
        %v1203 = vsub.f32 1.0, %v1202
        %v1204 = vmul.f32 %v1201, %v1203
        %v1205 = vadd.f32 %v1201, %v1204
        %vm1206 = vweird.f32 %v1184
        %vm1207 = vweird.f32 %v1201
        %vm1208 = vmor %vm1206, %vm1207
        %v1209 = vsel %vm1208, %v1201, %v1205
        %v1210 = vand.u32 2147483647, %v1184
        %vm1211 = vcmp.eq.f32.partialorder %v1210, 8.507059e+37
        %v1212 = vand.u32 %v1184, 2147483648
        %v1213 = vor.u32 1.1754944e-38, %v1212
        %v1214 = vsel %vm1211, %v1213, %v1209
        %v1215 = vmul.f32 1.0, %v1214
        %v1216 = vrcp.pop %v1185
        %v1217 = vmul.f32 %v1185, %v1216
        %v1218 = vsub.f32 1.0, %v1217
        %v1219 = vmul.f32 %v1216, %v1218
        %v1220 = vadd.f32 %v1216, %v1219
        %vm1221 = vweird.f32 %v1185
        %vm1222 = vweird.f32 %v1216
        %vm1223 = vmor %vm1221, %vm1222
        %v1224 = vsel %vm1223, %v1216, %v1220
        %v1225 = vand.u32 2147483647, %v1185
        %vm1226 = vcmp.eq.f32.partialorder %v1225, 8.507059e+37
        %v1227 = vand.u32 %v1185, 2147483648
        %v1228 = vor.u32 1.1754944e-38, %v1227
        %v1229 = vsel %vm1226, %v1228, %v1224
        %v1230 = vmul.f32 1.0, %v1229
        %v1231 = vtanh.pop %v1173
        %v1232 = vmul.f32 %v1215, %v1087
        %v1233 = vmul.f32 %v1200, %v1231
        %v1234 = vadd.f32 %v1232, %v1233
        %v1235 = vtanh.pop %v1234
        %v1236 = vmul.f32 %v1230, %v1235
        %1237 = vmatpush.msra.mxu0 %v645
        %1238 = vmatpush.msra.mxu0 %v641
        %1239 = vmatpush.msra.mxu0 %v637
        %1240 = vmatpush.msra.mxu0 %v633
        %1241 = vmatpush.msra.mxu0 %v629
        %1242 = vmatpush.msra.mxu0 %v625
        %1243 = vmatpush.msra.mxu0 %v621
        %1244 = vmatpush.msra.mxu0 %v617
        %1245 = vmatpush.msra.mxu0 %v613
        %1246 = vmatpush.msra.mxu0 %v609
        %1247 = vmatpush.msra.mxu0 %v605
        %1248 = vmatpush.msra.mxu0 %v601
        %1249 = vmatpush.msra.mxu0 %v597
        %1250 = vmatpush.msra.mxu0 %v593
        %1251 = vmatpush.msra.mxu0 %v589
        %1252 = vmatpush.msra.mxu0 %v585
        %1253 = vmatmul.f32.gmra.mxu0 %v1236
        %v1254 = vpop.f32.mrf.mxu0
        %v1255 = vadd.f32 0.0, %v1254
        %1256 = vdwg.mxu0
        %1257 = vmatpush.msra.mxu0 %v646
        %1258 = vmatpush.msra.mxu0 %v642
        %1259 = vmatpush.msra.mxu0 %v638
        %1260 = vmatpush.msra.mxu0 %v634
        %1261 = vmatpush.msra.mxu0 %v630
        %1262 = vmatpush.msra.mxu0 %v626
        %1263 = vmatpush.msra.mxu0 %v622
        %1264 = vmatpush.msra.mxu0 %v618
        %1265 = vmatpush.msra.mxu0 %v614
        %1266 = vmatpush.msra.mxu0 %v610
        %1267 = vmatpush.msra.mxu0 %v606
        %1268 = vmatpush.msra.mxu0 %v602
        %1269 = vmatpush.msra.mxu0 %v598
        %1270 = vmatpush.msra.mxu0 %v594
        %1271 = vmatpush.msra.mxu0 %v590
        %1272 = vmatpush.msra.mxu0 %v586
        %1273 = vmatmul.f32.gmra.mxu0 %v1236
        %v1274 = vpop.f32.mrf.mxu0
        %v1275 = vadd.f32 0.0, %v1274
        %1276 = vdwg.mxu0
        %1277 = vmatpush.msra.mxu0 %v647
        %1278 = vmatpush.msra.mxu0 %v643
        %1279 = vmatpush.msra.mxu0 %v639
        %1280 = vmatpush.msra.mxu0 %v635
        %1281 = vmatpush.msra.mxu0 %v631
        %1282 = vmatpush.msra.mxu0 %v627
        %1283 = vmatpush.msra.mxu0 %v623
        %1284 = vmatpush.msra.mxu0 %v619
        %1285 = vmatpush.msra.mxu0 %v615
        %1286 = vmatpush.msra.mxu0 %v611
        %1287 = vmatpush.msra.mxu0 %v607
        %1288 = vmatpush.msra.mxu0 %v603
        %1289 = vmatpush.msra.mxu0 %v599
        %1290 = vmatpush.msra.mxu0 %v595
        %1291 = vmatpush.msra.mxu0 %v591
        %1292 = vmatpush.msra.mxu0 %v587
        %1293 = vmatmul.f32.gmra.mxu0 %v1236
        %v1294 = vpop.f32.mrf.mxu0
        %v1295 = vadd.f32 0.0, %v1294
        %1296 = vdwg.mxu0
        %1297 = vmatpush.msra.mxu0 %v648
        %1298 = vmatpush.msra.mxu0 %v644
        %1299 = vmatpush.msra.mxu0 %v640
        %1300 = vmatpush.msra.mxu0 %v636
        %1301 = vmatpush.msra.mxu0 %v632
        %1302 = vmatpush.msra.mxu0 %v628
        %1303 = vmatpush.msra.mxu0 %v624
        %1304 = vmatpush.msra.mxu0 %v620
        %1305 = vmatpush.msra.mxu0 %v616
        %1306 = vmatpush.msra.mxu0 %v612
        %1307 = vmatpush.msra.mxu0 %v608
        %1308 = vmatpush.msra.mxu0 %v604
        %1309 = vmatpush.msra.mxu0 %v600
        %1310 = vmatpush.msra.mxu0 %v596
        %1311 = vmatpush.msra.mxu0 %v592
        %1312 = vmatpush.msra.mxu0 %v588
        %1313 = vmatmul.f32.gmra.mxu0 %v1236
        %v1314 = vpop.f32.mrf.mxu0
        %v1315 = vadd.f32 0.0, %v1314
        %1316 = vdwg.mxu0
        %v1317 = vadd.f32 %v451, %v1255
        %v1318 = vadd.f32 %v492, %v1275
        %v1319 = vadd.f32 %v533, %v1295
        %v1320 = vadd.f32 %v574, %v1315
        %v1321 = vxor.u32 %v1317, 2147483648
        %v1322 = vxor.u32 %v1318, 2147483648
        %v1323 = vxor.u32 %v1319, 2147483648
        %v1324 = vmul.f32 %v1321, 1.442695
        %v1325 = vpow.pop %v1324
        %v1326 = vmul.f32 %v1322, 1.442695
        %v1327 = vpow.pop %v1326
        %v1328 = vmul.f32 %v1323, 1.442695
        %v1329 = vpow.pop %v1328
        %v1330 = vadd.f32 %v1325, 1.0
        %v1331 = vadd.f32 %v1327, 1.0
        %v1332 = vadd.f32 %v1329, 1.0
        %v1333 = vrcp.pop %v1330
        %v1334 = vmul.f32 %v1330, %v1333
        %v1335 = vsub.f32 1.0, %v1334
        %v1336 = vmul.f32 %v1333, %v1335
        %v1337 = vadd.f32 %v1333, %v1336
        %vm1338 = vweird.f32 %v1330
        %vm1339 = vweird.f32 %v1333
        %vm1340 = vmor %vm1338, %vm1339
        %v1341 = vsel %vm1340, %v1333, %v1337
        %v1342 = vand.u32 2147483647, %v1330
        %vm1343 = vcmp.eq.f32.partialorder %v1342, 8.507059e+37
        %v1344 = vand.u32 %v1330, 2147483648
        %v1345 = vor.u32 1.1754944e-38, %v1344
        %v1346 = vsel %vm1343, %v1345, %v1341
        %v1347 = vmul.f32 1.0, %v1346
        %v1348 = vrcp.pop %v1331
        %v1349 = vmul.f32 %v1331, %v1348
        %v1350 = vsub.f32 1.0, %v1349
        %v1351 = vmul.f32 %v1348, %v1350
        %v1352 = vadd.f32 %v1348, %v1351
        %vm1353 = vweird.f32 %v1331
        %vm1354 = vweird.f32 %v1348
        %vm1355 = vmor %vm1353, %vm1354
        %v1356 = vsel %vm1355, %v1348, %v1352
        %v1357 = vand.u32 2147483647, %v1331
        %vm1358 = vcmp.eq.f32.partialorder %v1357, 8.507059e+37
        %v1359 = vand.u32 %v1331, 2147483648
        %v1360 = vor.u32 1.1754944e-38, %v1359
        %v1361 = vsel %vm1358, %v1360, %v1356
        %v1362 = vmul.f32 1.0, %v1361
        %v1363 = vrcp.pop %v1332
        %v1364 = vmul.f32 %v1332, %v1363
        %v1365 = vsub.f32 1.0, %v1364
        %v1366 = vmul.f32 %v1363, %v1365
        %v1367 = vadd.f32 %v1363, %v1366
        %vm1368 = vweird.f32 %v1332
        %vm1369 = vweird.f32 %v1363
        %vm1370 = vmor %vm1368, %vm1369
        %v1371 = vsel %vm1370, %v1363, %v1367
        %v1372 = vand.u32 2147483647, %v1332
        %vm1373 = vcmp.eq.f32.partialorder %v1372, 8.507059e+37
        %v1374 = vand.u32 %v1332, 2147483648
        %v1375 = vor.u32 1.1754944e-38, %v1374
        %v1376 = vsel %vm1373, %v1375, %v1371
        %v1377 = vmul.f32 1.0, %v1376
        %v1378 = vtanh.pop %v1320
        %v1379 = vmul.f32 %v1362, %v1234
        %v1380 = vmul.f32 %v1347, %v1378
        %v1381 = vadd.f32 %v1379, %v1380
        %v1382 = vtanh.pop %v1381
        %v1383 = vmul.f32 %v1377, %v1382
        %1384 = vmatpush.msra.mxu0 %v645
        %1385 = vmatpush.msra.mxu0 %v641
        %1386 = vmatpush.msra.mxu0 %v637
        %1387 = vmatpush.msra.mxu0 %v633
        %1388 = vmatpush.msra.mxu0 %v629
        %1389 = vmatpush.msra.mxu0 %v625
        %1390 = vmatpush.msra.mxu0 %v621
        %1391 = vmatpush.msra.mxu0 %v617
        %1392 = vmatpush.msra.mxu0 %v613
        %1393 = vmatpush.msra.mxu0 %v609
        %1394 = vmatpush.msra.mxu0 %v605
        %1395 = vmatpush.msra.mxu0 %v601
        %1396 = vmatpush.msra.mxu0 %v597
        %1397 = vmatpush.msra.mxu0 %v593
        %1398 = vmatpush.msra.mxu0 %v589
        %1399 = vmatpush.msra.mxu0 %v585
        %1400 = vmatmul.f32.gmra.mxu0 %v1383
        %v1401 = vpop.f32.mrf.mxu0
        %v1402 = vadd.f32 0.0, %v1401
        %1403 = vdwg.mxu0
        %1404 = vmatpush.msra.mxu0 %v646
        %1405 = vmatpush.msra.mxu0 %v642
        %1406 = vmatpush.msra.mxu0 %v638
        %1407 = vmatpush.msra.mxu0 %v634
        %1408 = vmatpush.msra.mxu0 %v630
        %1409 = vmatpush.msra.mxu0 %v626
        %1410 = vmatpush.msra.mxu0 %v622
        %1411 = vmatpush.msra.mxu0 %v618
        %1412 = vmatpush.msra.mxu0 %v614
        %1413 = vmatpush.msra.mxu0 %v610
        %1414 = vmatpush.msra.mxu0 %v606
        %1415 = vmatpush.msra.mxu0 %v602
        %1416 = vmatpush.msra.mxu0 %v598
        %1417 = vmatpush.msra.mxu0 %v594
        %1418 = vmatpush.msra.mxu0 %v590
        %1419 = vmatpush.msra.mxu0 %v586
        %1420 = vmatmul.f32.gmra.mxu0 %v1383
        %v1421 = vpop.f32.mrf.mxu0
        %v1422 = vadd.f32 0.0, %v1421
        %1423 = vdwg.mxu0
        %1424 = vmatpush.msra.mxu0 %v647
        %1425 = vmatpush.msra.mxu0 %v643
        %1426 = vmatpush.msra.mxu0 %v639
        %1427 = vmatpush.msra.mxu0 %v635
        %1428 = vmatpush.msra.mxu0 %v631
        %1429 = vmatpush.msra.mxu0 %v627
        %1430 = vmatpush.msra.mxu0 %v623
        %1431 = vmatpush.msra.mxu0 %v619
        %1432 = vmatpush.msra.mxu0 %v615
        %1433 = vmatpush.msra.mxu0 %v611
        %1434 = vmatpush.msra.mxu0 %v607
        %1435 = vmatpush.msra.mxu0 %v603
        %1436 = vmatpush.msra.mxu0 %v599
        %1437 = vmatpush.msra.mxu0 %v595
        %1438 = vmatpush.msra.mxu0 %v591
        %1439 = vmatpush.msra.mxu0 %v587
        %1440 = vmatmul.f32.gmra.mxu0 %v1383
        %v1441 = vpop.f32.mrf.mxu0
        %v1442 = vadd.f32 0.0, %v1441
        %1443 = vdwg.mxu0
        %1444 = vmatpush.msra.mxu0 %v648
        %1445 = vmatpush.msra.mxu0 %v644
        %1446 = vmatpush.msra.mxu0 %v640
        %1447 = vmatpush.msra.mxu0 %v636
        %1448 = vmatpush.msra.mxu0 %v632
        %1449 = vmatpush.msra.mxu0 %v628
        %1450 = vmatpush.msra.mxu0 %v624
        %1451 = vmatpush.msra.mxu0 %v620
        %1452 = vmatpush.msra.mxu0 %v616
        %1453 = vmatpush.msra.mxu0 %v612
        %1454 = vmatpush.msra.mxu0 %v608
        %1455 = vmatpush.msra.mxu0 %v604
        %1456 = vmatpush.msra.mxu0 %v600
        %1457 = vmatpush.msra.mxu0 %v596
        %1458 = vmatpush.msra.mxu0 %v592
        %1459 = vmatpush.msra.mxu0 %v588
        %1460 = vmatmul.f32.gmra.mxu0 %v1383
        %v1461 = vpop.f32.mrf.mxu0
        %v1462 = vadd.f32 0.0, %v1461
        %1463 = vdwg.mxu0
        %v1464 = vadd.f32 %v454, %v1402
        %v1465 = vadd.f32 %v495, %v1422
        %v1466 = vadd.f32 %v536, %v1442
        %v1467 = vadd.f32 %v577, %v1462
        %v1468 = vxor.u32 %v1464, 2147483648
        %v1469 = vxor.u32 %v1465, 2147483648
        %v1470 = vxor.u32 %v1466, 2147483648
        %v1471 = vmul.f32 %v1468, 1.442695
        %v1472 = vpow.pop %v1471
        %v1473 = vmul.f32 %v1469, 1.442695
        %v1474 = vpow.pop %v1473
        %v1475 = vmul.f32 %v1470, 1.442695
        %v1476 = vpow.pop %v1475
        %v1477 = vadd.f32 %v1472, 1.0
        %v1478 = vadd.f32 %v1474, 1.0
        %v1479 = vadd.f32 %v1476, 1.0
        %v1480 = vrcp.pop %v1477
        %v1481 = vmul.f32 %v1477, %v1480
        %v1482 = vsub.f32 1.0, %v1481
        %v1483 = vmul.f32 %v1480, %v1482
        %v1484 = vadd.f32 %v1480, %v1483
        %vm1485 = vweird.f32 %v1477
        %vm1486 = vweird.f32 %v1480
        %vm1487 = vmor %vm1485, %vm1486
        %v1488 = vsel %vm1487, %v1480, %v1484
        %v1489 = vand.u32 2147483647, %v1477
        %vm1490 = vcmp.eq.f32.partialorder %v1489, 8.507059e+37
        %v1491 = vand.u32 %v1477, 2147483648
        %v1492 = vor.u32 1.1754944e-38, %v1491
        %v1493 = vsel %vm1490, %v1492, %v1488
        %v1494 = vmul.f32 1.0, %v1493
        %v1495 = vrcp.pop %v1478
        %v1496 = vmul.f32 %v1478, %v1495
        %v1497 = vsub.f32 1.0, %v1496
        %v1498 = vmul.f32 %v1495, %v1497
        %v1499 = vadd.f32 %v1495, %v1498
        %vm1500 = vweird.f32 %v1478
        %vm1501 = vweird.f32 %v1495
        %vm1502 = vmor %vm1500, %vm1501
        %v1503 = vsel %vm1502, %v1495, %v1499
        %v1504 = vand.u32 2147483647, %v1478
        %vm1505 = vcmp.eq.f32.partialorder %v1504, 8.507059e+37
        %v1506 = vand.u32 %v1478, 2147483648
        %v1507 = vor.u32 1.1754944e-38, %v1506
        %v1508 = vsel %vm1505, %v1507, %v1503
        %v1509 = vmul.f32 1.0, %v1508
        %v1510 = vrcp.pop %v1479
        %v1511 = vmul.f32 %v1479, %v1510
        %v1512 = vsub.f32 1.0, %v1511
        %v1513 = vmul.f32 %v1510, %v1512
        %v1514 = vadd.f32 %v1510, %v1513
        %vm1515 = vweird.f32 %v1479
        %vm1516 = vweird.f32 %v1510
        %vm1517 = vmor %vm1515, %vm1516
        %v1518 = vsel %vm1517, %v1510, %v1514
        %v1519 = vand.u32 2147483647, %v1479
        %vm1520 = vcmp.eq.f32.partialorder %v1519, 8.507059e+37
        %v1521 = vand.u32 %v1479, 2147483648
        %v1522 = vor.u32 1.1754944e-38, %v1521
        %v1523 = vsel %vm1520, %v1522, %v1518
        %v1524 = vmul.f32 1.0, %v1523
        %v1525 = vtanh.pop %v1467
        %v1526 = vmul.f32 %v1509, %v1381
        %v1527 = vmul.f32 %v1494, %v1525
        %v1528 = vadd.f32 %v1526, %v1527
        %v1529 = vtanh.pop %v1528
        %v1530 = vmul.f32 %v1524, %v1529
        %1531 = vmatpush.msra.mxu0 %v645
        %1532 = vmatpush.msra.mxu0 %v641
        %1533 = vmatpush.msra.mxu0 %v637
        %1534 = vmatpush.msra.mxu0 %v633
        %1535 = vmatpush.msra.mxu0 %v629
        %1536 = vmatpush.msra.mxu0 %v625
        %1537 = vmatpush.msra.mxu0 %v621
        %1538 = vmatpush.msra.mxu0 %v617
        %1539 = vmatpush.msra.mxu0 %v613
        %1540 = vmatpush.msra.mxu0 %v609
        %1541 = vmatpush.msra.mxu0 %v605
        %1542 = vmatpush.msra.mxu0 %v601
        %1543 = vmatpush.msra.mxu0 %v597
        %1544 = vmatpush.msra.mxu0 %v593
        %1545 = vmatpush.msra.mxu0 %v589
        %1546 = vmatpush.msra.mxu0 %v585
        %1547 = vmatmul.f32.gmra.mxu0 %v1530
        %v1548 = vpop.f32.mrf.mxu0
        %v1549 = vadd.f32 0.0, %v1548
        %1550 = vdwg.mxu0
        %1551 = vmatpush.msra.mxu0 %v646
        %1552 = vmatpush.msra.mxu0 %v642
        %1553 = vmatpush.msra.mxu0 %v638
        %1554 = vmatpush.msra.mxu0 %v634
        %1555 = vmatpush.msra.mxu0 %v630
        %1556 = vmatpush.msra.mxu0 %v626
        %1557 = vmatpush.msra.mxu0 %v622
        %1558 = vmatpush.msra.mxu0 %v618
        %1559 = vmatpush.msra.mxu0 %v614
        %1560 = vmatpush.msra.mxu0 %v610
        %1561 = vmatpush.msra.mxu0 %v606
        %1562 = vmatpush.msra.mxu0 %v602
        %1563 = vmatpush.msra.mxu0 %v598
        %1564 = vmatpush.msra.mxu0 %v594
        %1565 = vmatpush.msra.mxu0 %v590
        %1566 = vmatpush.msra.mxu0 %v586
        %1567 = vmatmul.f32.gmra.mxu0 %v1530
        %v1568 = vpop.f32.mrf.mxu0
        %v1569 = vadd.f32 0.0, %v1568
        %1570 = vdwg.mxu0
        %1571 = vmatpush.msra.mxu0 %v647
        %1572 = vmatpush.msra.mxu0 %v643
        %1573 = vmatpush.msra.mxu0 %v639
        %1574 = vmatpush.msra.mxu0 %v635
        %1575 = vmatpush.msra.mxu0 %v631
        %1576 = vmatpush.msra.mxu0 %v627
        %1577 = vmatpush.msra.mxu0 %v623
        %1578 = vmatpush.msra.mxu0 %v619
        %1579 = vmatpush.msra.mxu0 %v615
        %1580 = vmatpush.msra.mxu0 %v611
        %1581 = vmatpush.msra.mxu0 %v607
        %1582 = vmatpush.msra.mxu0 %v603
        %1583 = vmatpush.msra.mxu0 %v599
        %1584 = vmatpush.msra.mxu0 %v595
        %1585 = vmatpush.msra.mxu0 %v591
        %1586 = vmatpush.msra.mxu0 %v587
        %1587 = vmatmul.f32.gmra.mxu0 %v1530
        %v1588 = vpop.f32.mrf.mxu0
        %v1589 = vadd.f32 0.0, %v1588
        %1590 = vdwg.mxu0
        %1591 = vmatpush.msra.mxu0 %v648
        %1592 = vmatpush.msra.mxu0 %v644
        %1593 = vmatpush.msra.mxu0 %v640
        %1594 = vmatpush.msra.mxu0 %v636
        %1595 = vmatpush.msra.mxu0 %v632
        %1596 = vmatpush.msra.mxu0 %v628
        %1597 = vmatpush.msra.mxu0 %v624
        %1598 = vmatpush.msra.mxu0 %v620
        %1599 = vmatpush.msra.mxu0 %v616
        %1600 = vmatpush.msra.mxu0 %v612
        %1601 = vmatpush.msra.mxu0 %v608
        %1602 = vmatpush.msra.mxu0 %v604
        %1603 = vmatpush.msra.mxu0 %v600
        %1604 = vmatpush.msra.mxu0 %v596
        %1605 = vmatpush.msra.mxu0 %v592
        %1606 = vmatpush.msra.mxu0 %v588
        %1607 = vmatmul.f32.gmra.mxu0 %v1530
        %v1608 = vpop.f32.mrf.mxu0
        %v1609 = vadd.f32 0.0, %v1608
        %1610 = vdwg.mxu0
        %v1611 = vadd.f32 %v457, %v1549
        %v1612 = vadd.f32 %v498, %v1569
        %v1613 = vadd.f32 %v539, %v1589
        %v1614 = vadd.f32 %v580, %v1609
        %v1615 = vxor.u32 %v1611, 2147483648
        %v1616 = vxor.u32 %v1612, 2147483648
        %v1617 = vxor.u32 %v1613, 2147483648
        %v1618 = vmul.f32 %v1615, 1.442695
        %v1619 = vpow.pop %v1618
        %v1620 = vmul.f32 %v1616, 1.442695
        %v1621 = vpow.pop %v1620
        %v1622 = vmul.f32 %v1617, 1.442695
        %v1623 = vpow.pop %v1622
        %v1624 = vadd.f32 %v1619, 1.0
        %v1625 = vadd.f32 %v1621, 1.0
        %v1626 = vadd.f32 %v1623, 1.0
        %v1627 = vrcp.pop %v1624
        %v1628 = vmul.f32 %v1624, %v1627
        %v1629 = vsub.f32 1.0, %v1628
        %v1630 = vmul.f32 %v1627, %v1629
        %v1631 = vadd.f32 %v1627, %v1630
        %vm1632 = vweird.f32 %v1624
        %vm1633 = vweird.f32 %v1627
        %vm1634 = vmor %vm1632, %vm1633
        %v1635 = vsel %vm1634, %v1627, %v1631
        %v1636 = vand.u32 2147483647, %v1624
        %vm1637 = vcmp.eq.f32.partialorder %v1636, 8.507059e+37
        %v1638 = vand.u32 %v1624, 2147483648
        %v1639 = vor.u32 1.1754944e-38, %v1638
        %v1640 = vsel %vm1637, %v1639, %v1635
        %v1641 = vmul.f32 1.0, %v1640
        %v1642 = vrcp.pop %v1625
        %v1643 = vmul.f32 %v1625, %v1642
        %v1644 = vsub.f32 1.0, %v1643
        %v1645 = vmul.f32 %v1642, %v1644
        %v1646 = vadd.f32 %v1642, %v1645
        %vm1647 = vweird.f32 %v1625
        %vm1648 = vweird.f32 %v1642
        %vm1649 = vmor %vm1647, %vm1648
        %v1650 = vsel %vm1649, %v1642, %v1646
        %v1651 = vand.u32 2147483647, %v1625
        %vm1652 = vcmp.eq.f32.partialorder %v1651, 8.507059e+37
        %v1653 = vand.u32 %v1625, 2147483648
        %v1654 = vor.u32 1.1754944e-38, %v1653
        %v1655 = vsel %vm1652, %v1654, %v1650
        %v1656 = vmul.f32 1.0, %v1655
        %v1657 = vrcp.pop %v1626
        %v1658 = vmul.f32 %v1626, %v1657
        %v1659 = vsub.f32 1.0, %v1658
        %v1660 = vmul.f32 %v1657, %v1659
        %v1661 = vadd.f32 %v1657, %v1660
        %vm1662 = vweird.f32 %v1626
        %vm1663 = vweird.f32 %v1657
        %vm1664 = vmor %vm1662, %vm1663
        %v1665 = vsel %vm1664, %v1657, %v1661
        %v1666 = vand.u32 2147483647, %v1626
        %vm1667 = vcmp.eq.f32.partialorder %v1666, 8.507059e+37
        %v1668 = vand.u32 %v1626, 2147483648
        %v1669 = vor.u32 1.1754944e-38, %v1668
        %v1670 = vsel %vm1667, %v1669, %v1665
        %v1671 = vmul.f32 1.0, %v1670
        %v1672 = vtanh.pop %v1614
        %v1673 = vmul.f32 %v1656, %v1528
        %v1674 = vmul.f32 %v1641, %v1672
        %v1675 = vadd.f32 %v1673, %v1674
        %v1676 = vtanh.pop %v1675
        %v1677 = vmul.f32 %v1671, %v1676
        %1678 = vmatpush.msra.mxu0 %v645
        %1679 = vmatpush.msra.mxu0 %v641
        %1680 = vmatpush.msra.mxu0 %v637
        %1681 = vmatpush.msra.mxu0 %v633
        %1682 = vmatpush.msra.mxu0 %v629
        %1683 = vmatpush.msra.mxu0 %v625
        %1684 = vmatpush.msra.mxu0 %v621
        %1685 = vmatpush.msra.mxu0 %v617
        %1686 = vmatpush.msra.mxu0 %v613
        %1687 = vmatpush.msra.mxu0 %v609
        %1688 = vmatpush.msra.mxu0 %v605
        %1689 = vmatpush.msra.mxu0 %v601
        %1690 = vmatpush.msra.mxu0 %v597
        %1691 = vmatpush.msra.mxu0 %v593
        %1692 = vmatpush.msra.mxu0 %v589
        %1693 = vmatpush.msra.mxu0 %v585
        %1694 = vmatmul.f32.gmra.mxu0 %v1677
        %v1695 = vpop.f32.mrf.mxu0
        %v1696 = vadd.f32 0.0, %v1695
        %1697 = vdwg.mxu0
        %1698 = vmatpush.msra.mxu0 %v646
        %1699 = vmatpush.msra.mxu0 %v642
        %1700 = vmatpush.msra.mxu0 %v638
        %1701 = vmatpush.msra.mxu0 %v634
        %1702 = vmatpush.msra.mxu0 %v630
        %1703 = vmatpush.msra.mxu0 %v626
        %1704 = vmatpush.msra.mxu0 %v622
        %1705 = vmatpush.msra.mxu0 %v618
        %1706 = vmatpush.msra.mxu0 %v614
        %1707 = vmatpush.msra.mxu0 %v610
        %1708 = vmatpush.msra.mxu0 %v606
        %1709 = vmatpush.msra.mxu0 %v602
        %1710 = vmatpush.msra.mxu0 %v598
        %1711 = vmatpush.msra.mxu0 %v594
        %1712 = vmatpush.msra.mxu0 %v590
        %1713 = vmatpush.msra.mxu0 %v586
        %1714 = vmatmul.f32.gmra.mxu0 %v1677
        %v1715 = vpop.f32.mrf.mxu0
        %v1716 = vadd.f32 0.0, %v1715
        %1717 = vdwg.mxu0
        %1718 = vmatpush.msra.mxu0 %v647
        %1719 = vmatpush.msra.mxu0 %v643
        %1720 = vmatpush.msra.mxu0 %v639
        %1721 = vmatpush.msra.mxu0 %v635
        %1722 = vmatpush.msra.mxu0 %v631
        %1723 = vmatpush.msra.mxu0 %v627
        %1724 = vmatpush.msra.mxu0 %v623
        %1725 = vmatpush.msra.mxu0 %v619
        %1726 = vmatpush.msra.mxu0 %v615
        %1727 = vmatpush.msra.mxu0 %v611
        %1728 = vmatpush.msra.mxu0 %v607
        %1729 = vmatpush.msra.mxu0 %v603
        %1730 = vmatpush.msra.mxu0 %v599
        %1731 = vmatpush.msra.mxu0 %v595
        %1732 = vmatpush.msra.mxu0 %v591
        %1733 = vmatpush.msra.mxu0 %v587
        %1734 = vmatmul.f32.gmra.mxu0 %v1677
        %v1735 = vpop.f32.mrf.mxu0
        %v1736 = vadd.f32 0.0, %v1735
        %1737 = vdwg.mxu0
        %1738 = vmatpush.msra.mxu0 %v648
        %1739 = vmatpush.msra.mxu0 %v644
        %1740 = vmatpush.msra.mxu0 %v640
        %1741 = vmatpush.msra.mxu0 %v636
        %1742 = vmatpush.msra.mxu0 %v632
        %1743 = vmatpush.msra.mxu0 %v628
        %1744 = vmatpush.msra.mxu0 %v624
        %1745 = vmatpush.msra.mxu0 %v620
        %1746 = vmatpush.msra.mxu0 %v616
        %1747 = vmatpush.msra.mxu0 %v612
        %1748 = vmatpush.msra.mxu0 %v608
        %1749 = vmatpush.msra.mxu0 %v604
        %1750 = vmatpush.msra.mxu0 %v600
        %1751 = vmatpush.msra.mxu0 %v596
        %1752 = vmatpush.msra.mxu0 %v592
        %1753 = vmatpush.msra.mxu0 %v588
        %1754 = vmatmul.f32.gmra.mxu0 %v1677
        %v1755 = vpop.f32.mrf.mxu0
        %v1756 = vadd.f32 0.0, %v1755
        %1757 = vdwg.mxu0
        %v1758 = vadd.f32 %v460, %v1696
        %v1759 = vadd.f32 %v501, %v1716
        %v1760 = vadd.f32 %v542, %v1736
        %v1761 = vadd.f32 %v583, %v1756
        %v1762 = vxor.u32 %v1758, 2147483648
        %v1763 = vxor.u32 %v1759, 2147483648
        %v1764 = vxor.u32 %v1760, 2147483648
        %v1765 = vmul.f32 %v1762, 1.442695
        %v1766 = vpow.pop %v1765
        %v1767 = vmul.f32 %v1763, 1.442695
        %v1768 = vpow.pop %v1767
        %v1769 = vmul.f32 %v1764, 1.442695
        %v1770 = vpow.pop %v1769
        %v1771 = vadd.f32 %v1766, 1.0
        %v1772 = vadd.f32 %v1768, 1.0
        %v1773 = vadd.f32 %v1770, 1.0
        %v1774 = vrcp.pop %v1771
        %v1775 = vmul.f32 %v1771, %v1774
        %v1776 = vsub.f32 1.0, %v1775
        %v1777 = vmul.f32 %v1774, %v1776
        %v1778 = vadd.f32 %v1774, %v1777
        %vm1779 = vweird.f32 %v1771
        %vm1780 = vweird.f32 %v1774
        %vm1781 = vmor %vm1779, %vm1780
        %v1782 = vsel %vm1781, %v1774, %v1778
        %v1783 = vand.u32 2147483647, %v1771
        %vm1784 = vcmp.eq.f32.partialorder %v1783, 8.507059e+37
        %v1785 = vand.u32 %v1771, 2147483648
        %v1786 = vor.u32 1.1754944e-38, %v1785
        %v1787 = vsel %vm1784, %v1786, %v1782
        %v1788 = vmul.f32 1.0, %v1787
        %v1789 = vrcp.pop %v1772
        %v1790 = vmul.f32 %v1772, %v1789
        %v1791 = vsub.f32 1.0, %v1790
        %v1792 = vmul.f32 %v1789, %v1791
        %v1793 = vadd.f32 %v1789, %v1792
        %vm1794 = vweird.f32 %v1772
        %vm1795 = vweird.f32 %v1789
        %vm1796 = vmor %vm1794, %vm1795
        %v1797 = vsel %vm1796, %v1789, %v1793
        %v1798 = vand.u32 2147483647, %v1772
        %vm1799 = vcmp.eq.f32.partialorder %v1798, 8.507059e+37
        %v1800 = vand.u32 %v1772, 2147483648
        %v1801 = vor.u32 1.1754944e-38, %v1800
        %v1802 = vsel %vm1799, %v1801, %v1797
        %v1803 = vmul.f32 1.0, %v1802
        %v1804 = vrcp.pop %v1773
        %v1805 = vmul.f32 %v1773, %v1804
        %v1806 = vsub.f32 1.0, %v1805
        %v1807 = vmul.f32 %v1804, %v1806
        %v1808 = vadd.f32 %v1804, %v1807
        %vm1809 = vweird.f32 %v1773
        %vm1810 = vweird.f32 %v1804
        %vm1811 = vmor %vm1809, %vm1810
        %v1812 = vsel %vm1811, %v1804, %v1808
        %v1813 = vand.u32 2147483647, %v1773
        %vm1814 = vcmp.eq.f32.partialorder %v1813, 8.507059e+37
        %v1815 = vand.u32 %v1773, 2147483648
        %v1816 = vor.u32 1.1754944e-38, %v1815
        %v1817 = vsel %vm1814, %v1816, %v1812
        %v1818 = vmul.f32 1.0, %v1817
        %v1819 = vtanh.pop %v1761
        %v1820 = vmul.f32 %v1803, %v1675
        %v1821 = vmul.f32 %v1788, %v1819
        %v1822 = vadd.f32 %v1820, %v1821
        %v1823 = vtanh.pop %v1822
        %v1824 = vmul.f32 %v1818, %v1823
        %v1825 = vld [vmem:[%s4] sm:$0xff]
        %v1826 = vld [vmem:[%s4 + $0x8] sm:$0xff]
        %v1827 = vld [vmem:[%s4 + $0x10] sm:$0xff]
        %v1828 = vld [vmem:[%s4 + $0x18] sm:$0xff]
        %v1829 = vld [vmem:[%s4 + $0x20] sm:$0xff]
        %v1830 = vld [vmem:[%s4 + $0x28] sm:$0xff]
        %v1831 = vld [vmem:[%s4 + $0x30] sm:$0xff]
        %v1832 = vld [vmem:[%s4 + $0x38] sm:$0xff]
        %v1833 = vld [vmem:[%s4 + $0x40] sm:$0xff]
        %v1834 = vld [vmem:[%s4 + $0x48] sm:$0xff]
        %v1835 = vld [vmem:[%s4 + $0x50] sm:$0xff]
        %v1836 = vld [vmem:[%s4 + $0x58] sm:$0xff]
        %v1837 = vld [vmem:[%s4 + $0x60] sm:$0xff]
        %v1838 = vld [vmem:[%s4 + $0x68] sm:$0xff]
        %v1839 = vld [vmem:[%s4 + $0x70] sm:$0xff]
        %v1840 = vld [vmem:[%s4 + $0x78] sm:$0xff]
        %v1841 = vld [vmem:[%s5] sm:$0x1]
        %v1843 = vperm.slane %v1841, 0
        %1845 = vmatpush.msra.mxu0 %v1840
        %1846 = vmatpush.msra.mxu0 %v1839
        %1847 = vmatpush.msra.mxu0 %v1838
        %1848 = vmatpush.msra.mxu0 %v1837
        %1849 = vmatpush.msra.mxu0 %v1836
        %1850 = vmatpush.msra.mxu0 %v1835
        %1851 = vmatpush.msra.mxu0 %v1834
        %1852 = vmatpush.msra.mxu0 %v1833
        %1853 = vmatpush.msra.mxu0 %v1832
        %1854 = vmatpush.msra.mxu0 %v1831
        %1855 = vmatpush.msra.mxu0 %v1830
        %1856 = vmatpush.msra.mxu0 %v1829
        %1857 = vmatpush.msra.mxu0 %v1828
        %1858 = vmatpush.msra.mxu0 %v1827
        %1859 = vmatpush.msra.mxu0 %v1826
        %1860 = vmatpush.msra.mxu0 %v1825
        %1861 = vmatmul.f32.gmra.mxu0 %v1824
        %v1862 = vpop.f32.mrf.mxu0
        %v1863 = vadd.f32 %v1843, %v1862
        %1864 = vdwg.mxu0
        %v1865 = vmul.f32 %v1863, 0.5
        %v1866 = vmul.f32 %v1865, 1.442695
        %v1867 = vpow.pop %v1866
        %v1868 = vld [vmem:[%s352] sm:$0xff]
        %1870 = vrot.lane.b32.xlu0 %v1868, 16
        %v1871 = vpop.permute.xlu0 %1870
        %v1873 = vmul.f32 %v1867, %v1871
        %1875 = vrot.lane.b32.xlu0 %v1873, 112
        %v1876 = vpop.permute.xlu0 %1875
        %v1878 = vadd.f32 %v1863, %v1876
        %1880 = vrot.lane.b32.xlu0 %v1863, 16
        %v1881 = vpop.permute.xlu0 %1880
        %vm1883 = vcmask 130048
        %v1884 = vsel %vm1883, %v1878, %v1881
        %vm1885 = vcmask 261120
        %v1886 = vsel %vm1885, %v1884, %v1881
        %vm1887 = vcmask 392192
        %v1888 = vsel %vm1887, %v1886, 0.0
        %1889 = vst [vmem:[%s356] sm:$0xff] %v1888
        %p1890 = scmp.lt.s32.totalorder %s18, 1
        %s1891 = scalar_select %p1890, %s18, 1
        %s1892 = smul.addr %s1891, 8
        %s1893 = scalar_lea.vmem %s7, %s1892
        // Predicated region
        $region87: #{encoder_forward.1} parent=81 // pred_check
          %p1894 = pneg %p193
        $region88: #{encoder_forward.1} parent=81 // pred_check_branch
          %1896 = sbr.rel (%p1894) target = $region90
        $region89: #{encoder_forward.1} parent=81 // pred_region
          _
        $region90: #{encoder_forward.1} parent=81 // pred_fallthru
          _
      $region82: #{encoder_forward.1} parent=5 // pred_fallthru
        _
      %p1897 = scmp.le.s32.totalorder 2, %s13
      // Predicated region
      $region91: #{encoder_forward.1} parent=5 // pred_check
        %p1898 = pneg %p1897
      $region92: #{encoder_forward.1} parent=5 // pred_check_branch
        %1900 = sbr.rel (%p1898) target = $region94
      $region93: #{encoder_forward.1} parent=5 // pred_region
        %s1901 = ssub.s32 %s13, 2
        // Predicated region
        $region95: #{encoder_forward.1} parent=93 // pred_check
          %p1902 = pneg %p199
        $region96: #{encoder_forward.1} parent=93 // pred_check_branch
          %1904 = sbr.rel (%p1902) target = $region98
        $region97: #{encoder_forward.1} parent=93 // pred_region
          %p1905 = scmp.lt.s32.totalorder %s19, 1
          %s1906 = scalar_select %p1905, %s19, 1
          %s1907 = smul.addr %s1906, 8
          %s1908 = scalar_lea.vmem %s7, %s1907
        $region98: #{encoder_forward.1} parent=93 // pred_fallthru
          _
      $region94: #{encoder_forward.1} parent=5 // pred_fallthru
        _
    $region6: #{encoder_forward.1} parent=1 // loop_footer
      %s17 = sadd.s32 1, %s13
    $region7: #{encoder_forward.1} parent=1 // loop_footer_branch
      %12 = sbr.rel target = $region3
    $region8: #{encoder_forward.1} parent=1 // loop_exit
      _

</llo_original>
